<compile_context>
chip_gen: v7x
topology: tpu7x:2x2x1
jax: 0.10.0
libtpu: 0.0.40
codegen_flags: <defaults>
</compile_context>

<pallas_src>
import functools

import jax
import jax.numpy as jnp
import numpy as np
from jax.experimental import pallas as pl
from jax.experimental.pallas import tpu as pltpu

HIDDEN = 128       # LSTM hidden size (fixed by the module)
FC1 = 256          # fc1 output size (fixed by the module)
TK_MAX = 2048      # max K tile: 2 x (2048 x 512 x 2B) ~= 4 MiB double-buffered (v7x-safe)
NEG_INF = -1e30    # bias for padded softmax columns -> exp() == 0 exactly

# Gate slices below assume 128-lane alignment of the 4*HIDDEN gate vector.
assert HIDDEN % 128 == 0 and (4 * HIDDEN) % 128 == 0, "gate slices must stay lane-aligned"


def _round_up(x, m):
    return ((x + m - 1) // m) * m


# ----------------------------------------------------------------------------
# Kernel
# ----------------------------------------------------------------------------
def actor_kernel(x_ref, wih_ref, bg_ref, w1_ref, b1_ref, w2_ref, b2_ref,
                 out_ref, gates_acc, *, ma_aims_num):
    """grid = (k_pad // TK,): accumulate the LSTM input GEMV over K, finalize on last step."""
    k = pl.program_id(0)

    @pl.when(k == 0)
    def _init():
        gates_acc[...] = jnp.zeros_like(gates_acc)

    # (1, TK) bf16 @ (TK, 4H) bf16 -> f32 accumulation on the MXU.
    gates_acc[...] += jnp.dot(x_ref[...], wih_ref[...],
                              preferred_element_type=jnp.float32)

    @pl.when(k == pl.num_programs(0) - 1)
    def _finalize():
        gates = gates_acc[...] + bg_ref[...]                       # (1, 4H) f32
        i_g = jax.nn.sigmoid(gates[:, 0 * HIDDEN:1 * HIDDEN])
        # forget gate skipped: c0 == 0 so f * c0 == 0
        g_g = jnp.tanh(gates[:, 2 * HIDDEN:3 * HIDDEN])
        o_g = jax.nn.sigmoid(gates[:, 3 * HIDDEN:4 * HIDDEN])
        h = o_g * jnp.tanh(i_g * g_g)                              # (1, H) f32

        # fc1 + relu
        a1 = jnp.dot(h.astype(jnp.bfloat16), w1_ref[...],
                     preferred_element_type=jnp.float32) + b1_ref[...]
        a1 = jnp.maximum(a1, 0.0)                                  # (1, FC1) f32
        a1_b = a1.astype(jnp.bfloat16)

        # fc2 per output row: (1,256)x(256,Npad) MXU dot + lane-axis softmax.
        b2 = b2_ref[...]                                           # (M, Npad) f32
        for m in range(ma_aims_num):                               # small static unroll
            logits = jnp.dot(a1_b, w2_ref[m],
                             preferred_element_type=jnp.float32) + b2[m:m + 1, :]
            logits = logits - jnp.max(logits, axis=-1, keepdims=True)
            e = jnp.exp(logits)                                    # padded lanes -> exactly 0
            out_ref[pl.ds(m, 1), :] = e / jnp.sum(e, axis=-1, keepdims=True)


# ----------------------------------------------------------------------------
# Parameter init (PyTorch-equivalent, f32) and one-time device-layout packing
# ----------------------------------------------------------------------------
def init_actor_params(key, ma_aims_num, node_num, user_num):
    """Raw f32 parameters matching the PyTorch module's init (used by the reference)."""
    input_size = (ma_aims_num * node_num + 3 * 2 * node_num
                  + user_num * (node_num * node_num + node_num)
                  + user_num * (4 + ma_aims_num) + node_num * 3)
    output_size = ma_aims_num * node_num
    ks = jax.random.split(key, 7)

    k_lstm = 1.0 / np.sqrt(HIDDEN)
    w_ih = jax.random.uniform(ks[0], (4 * HIDDEN, input_size), jnp.float32, -k_lstm, k_lstm)
    b_ih = jax.random.uniform(ks[1], (4 * HIDDEN,), jnp.float32, -k_lstm, k_lstm)
    b_hh = jax.random.uniform(ks[2], (4 * HIDDEN,), jnp.float32, -k_lstm, k_lstm)
    # NOTE: W_hh exists in the module but multiplies h0 == 0 (seq_len == 1), so it
    # never affects the output and is omitted.

    xav1 = np.sqrt(6.0 / (HIDDEN + FC1))
    w1 = jax.random.uniform(ks[3], (FC1, HIDDEN), jnp.float32, -xav1, xav1)
    b1 = jax.random.uniform(ks[4], (FC1,), jnp.float32, -k_lstm, k_lstm)

    xav2 = np.sqrt(6.0 / (FC1 + output_size))
    w2 = jax.random.uniform(ks[5], (output_size, FC1), jnp.float32, -xav2, xav2)
    kb2 = 1.0 / np.sqrt(FC1)
    b2 = jax.random.uniform(ks[6], (output_size,), jnp.float32, -kb2, kb2)

    return dict(w_ih=w_ih, b_ih=b_ih, b_hh=b_hh, w1=w1, b1=b1, w2=w2, b2=b2,
                input_size=input_size, output_size=output_size)


def pack_actor_params(raw, ma_aims_num, node_num):
    """One-time device layout: pre-transpose / zero-pad / bf16-cast (NOT per call)."""
    input_size = raw["input_size"]
    k_align = _round_up(input_size, 128)
    tk = min(TK_MAX, k_align)
    k_pad = _round_up(input_size, tk)
    n_pad = _round_up(node_num, 128)

    wih_t = jnp.zeros((k_pad, 4 * HIDDEN), jnp.bfloat16)
    wih_t = wih_t.at[:input_size, :].set(raw["w_ih"].T.astype(jnp.bfloat16))
    bg = (raw["b_ih"] + raw["b_hh"])[None, :].astype(jnp.float32)          # (1, 4H)

    w1_t = raw["w1"].T.astype(jnp.bfloat16)                                # (H, FC1)
    b1 = raw["b1"][None, :].astype(jnp.float32)                            # (1, FC1)

    # fc2: (M*N, FC1) -> (M, FC1, N_pad); padded output columns get zero weight.
    w2_r = raw["w2"].reshape(ma_aims_num, node_num, FC1).transpose(0, 2, 1)
    w2_p = jnp.zeros((ma_aims_num, FC1, n_pad), jnp.bfloat16)
    w2_p = w2_p.at[:, :, :node_num].set(w2_r.astype(jnp.bfloat16))
    # Padded logit columns get a -1e30 bias so exp() is exactly 0 in the softmax.
    b2_p = jnp.full((ma_aims_num, n_pad), NEG_INF, jnp.float32)
    b2_p = b2_p.at[:, :node_num].set(raw["b2"].reshape(ma_aims_num, node_num))

    packed = dict(wih_t=wih_t, bg=bg, w1_t=w1_t, b1=b1, w2_p=w2_p, b2_p=b2_p)
    cfg = dict(ma_aims_num=ma_aims_num, node_num=node_num,
               input_size=input_size, k_pad=k_pad, tk=tk, n_pad=n_pad)
    return packed, cfg


# ----------------------------------------------------------------------------
# pallas_call wrapper
# ----------------------------------------------------------------------------
def build_actor_forward(cfg):
    M = cfg["ma_aims_num"]
    node_num = cfg["node_num"]
    input_size = cfg["input_size"]
    k_pad, tk, n_pad = cfg["k_pad"], cfg["tk"], cfg["n_pad"]
    grid = (k_pad // tk,)

    kernel = functools.partial(actor_kernel, ma_aims_num=M)

    flops = 2 * k_pad * 4 * HIDDEN + 2 * HIDDEN * FC1 + 2 * M * FC1 * n_pad
    bytes_accessed = (k_pad * 2                              # x (bf16)
                      + k_pad * 4 * HIDDEN * 2               # W_ih^T (bf16)
                      + 4 * HIDDEN * 4                       # combined LSTM bias
                      + HIDDEN * FC1 * 2 + FC1 * 4           # fc1
                      + M * FC1 * n_pad * 2 + M * n_pad * 4  # fc2
                      + M * n_pad * 4)                       # output
    cost = pl.CostEstimate(flops=flops,
                           transcendentals=5 * HIDDEN + M * n_pad,
                           bytes_accessed=bytes_accessed)

    call = pl.pallas_call(
        kernel,
        out_shape=jax.ShapeDtypeStruct((M, n_pad), jnp.float32),
        grid_spec=pltpu.PrefetchScalarGridSpec(
            num_scalar_prefetch=0,
            grid=grid,
            in_specs=[
                pl.BlockSpec((1, tk), lambda k: (0, k)),             # x row (bf16)
                pl.BlockSpec((tk, 4 * HIDDEN), lambda k: (k, 0)),    # W_ih^T (bf16, streamed)
                pl.BlockSpec((1, 4 * HIDDEN), lambda k: (0, 0)),     # b_ih + b_hh (f32)
                pl.BlockSpec((HIDDEN, FC1), lambda k: (0, 0)),       # W1^T (bf16)
                pl.BlockSpec((1, FC1), lambda k: (0, 0)),            # b1 (f32)
                pl.BlockSpec((M, FC1, n_pad), lambda k: (0, 0, 0)),  # W2 per-row (bf16)
                pl.BlockSpec((M, n_pad), lambda k: (0, 0)),          # b2 (f32, -inf padded)
            ],
            out_specs=pl.BlockSpec((M, n_pad), lambda k: (0, 0)),
            scratch_shapes=[pltpu.VMEM((1, 4 * HIDDEN), jnp.float32)],
        ),
        compiler_params=pltpu.CompilerParams(
            dimension_semantics=("arbitrary",),         # K axis is a reduction
            vmem_limit_bytes=32 * 1024 * 1024,          # usage ~5 MiB at TK_MAX; v7x-safe
        ),
        cost_estimate=cost,
    )

    @jax.jit
    def forward(x, packed):
        # Per-call glue is only padding + bf16 cast of the input row vector.
        xp = jnp.zeros((1, k_pad), jnp.bfloat16)
        xp = xp.at[0, :input_size].set(x.astype(jnp.bfloat16))
        probs = call(xp, packed["wih_t"], packed["bg"], packed["w1_t"],
                     packed["b1"], packed["w2_p"], packed["b2_p"])
        return probs[:, :node_num]

    return forward


# ----------------------------------------------------------------------------
# References
# ----------------------------------------------------------------------------
def actor_forward_reference(x, p, ma_aims_num, node_num):
    """Pure f32 reference matching the PyTorch forward."""
    gates = x @ p["w_ih"].T + p["b_ih"] + p["b_hh"]
    i_g, f_g, g_g, o_g = jnp.split(gates, 4)
    h = jax.nn.sigmoid(o_g) * jnp.tanh(jax.nn.sigmoid(i_g) * jnp.tanh(g_g))
    a1 = jax.nn.relu(h @ p["w1"].T + p["b1"])
    logits = a1 @ p["w2"].T + p["b2"]
    return jax.nn.softmax(logits.reshape(ma_aims_num, node_num), axis=1)


def actor_forward_reference_bf16(x, p, ma_aims_num, node_num):
    """f32 math on bf16-rounded operands: matches what the kernel streams."""
    bf = lambda a: a.astype(jnp.bfloat16).astype(jnp.float32)
    gates = bf(x) @ bf(p["w_ih"]).T + p["b_ih"] + p["b_hh"]
    i_g, f_g, g_g, o_g = jnp.split(gates, 4)
    h = jax.nn.sigmoid(o_g) * jnp.tanh(jax.nn.sigmoid(i_g) * jnp.tanh(g_g))
    a1 = jax.nn.relu(bf(h) @ bf(p["w1"]).T + p["b1"])
    logits = bf(a1) @ bf(p["w2"]).T + p["b2"]
    return jax.nn.softmax(logits.reshape(ma_aims_num, node_num), axis=1)


# ----------------------------------------------------------------------------
if __name__ == "__main__":
    # Small, forward-consistent sizes -> input_size = 264.
    ma_aims_num, node_num, user_num = 4, 8, 2

    key = jax.random.PRNGKey(0)
    k_param, k_x = jax.random.split(key)
    raw = init_actor_params(k_param, ma_aims_num, node_num, user_num)
    packed, cfg = pack_actor_params(raw, ma_aims_num, node_num)   # one-time layout
    forward = build_actor_forward(cfg)

    x = jax.random.normal(k_x, (raw["input_size"],), jnp.float32)

    probs = jax.block_until_ready(forward(x, packed))
    assert probs.shape == (ma_aims_num, node_num)

    # Rows are valid probability distributions.
    np.testing.assert_allclose(np.asarray(probs).sum(axis=1),
                               np.ones(ma_aims_num), rtol=1e-5, atol=1e-5)
    # Tight check vs. a reference using the same bf16-rounded weights/activations.
    ref_b = actor_forward_reference_bf16(x, raw, ma_aims_num, node_num)
    np.testing.assert_allclose(np.asarray(probs), np.asarray(ref_b),
                               rtol=2e-3, atol=2e-4)
    # Loose check vs. the pure-f32 PyTorch-equivalent reference (bf16 streaming).
    ref = actor_forward_reference(x, raw, ma_aims_num, node_num)
    np.testing.assert_allclose(np.asarray(probs), np.asarray(ref),
                               rtol=5e-2, atol=5e-3)

    print("KERNEL_OK")
</pallas_src>

<mosaic_0001>
module attributes {stable_mosaic.version = 11 : i64} {
  func.func @actor_kernel(%arg0: i32, %arg1: memref<1x384xbf16, #tpu.memory_space<vmem>>, %arg2: memref<384x512xbf16, #tpu.memory_space<vmem>>, %arg3: memref<1x512xf32, #tpu.memory_space<vmem>>, %arg4: memref<128x256xbf16, #tpu.memory_space<vmem>>, %arg5: memref<1x256xf32, #tpu.memory_space<vmem>>, %arg6: memref<4x256x128xbf16, #tpu.memory_space<vmem>>, %arg7: memref<4x128xf32, #tpu.memory_space<vmem>>, %arg8: memref<4x128xf32, #tpu.memory_space<vmem>>, %arg9: memref<1x512xf32, #tpu.memory_space<vmem>>) attributes {dimension_semantics = [#tpu.dimension_semantics<arbitrary>], iteration_bounds = array<i64: 1>, scalar_prefetch = 0 : i64, scratch_operands = 1 : i64, tpu.core_type = #tpu.core_type<tc>, window_params = [{transform_indices = @transform_0, window_bounds = array<i64: 1, 384>}, {transform_indices = @transform_1, window_bounds = array<i64: 384, 512>}, {pipeline_mode = #tpu.pipeline_mode<synchronous>, transform_indices = @transform_2, window_bounds = array<i64: 1, 512>}, {pipeline_mode = #tpu.pipeline_mode<synchronous>, transform_indices = @transform_3, window_bounds = array<i64: 128, 256>}, {pipeline_mode = #tpu.pipeline_mode<synchronous>, transform_indices = @transform_4, window_bounds = array<i64: 1, 256>}, {pipeline_mode = #tpu.pipeline_mode<synchronous>, transform_indices = @transform_5, window_bounds = array<i64: 4, 256, 128>}, {pipeline_mode = #tpu.pipeline_mode<synchronous>, transform_indices = @transform_6, window_bounds = array<i64: 4, 128>}, {pipeline_mode = #tpu.pipeline_mode<synchronous>, transform_indices = @transform_7, window_bounds = array<i64: 4, 128>}]} {
    %c0_i32 = arith.constant 0 : i32
    %0 = arith.cmpi eq, %arg0, %c0_i32 : i32
    %1 = arith.extui %0 : i1 to i32
    %c0_i32_0 = arith.constant 0 : i32
    %2 = arith.cmpi ne, %1, %c0_i32_0 : i32
    scf.if %2 {
      %cst_10 = arith.constant 0.000000e+00 : f32
      %12 = vector.broadcast %cst_10 : f32 to vector<1x512xf32>
      %c0_11 = arith.constant 0 : index
      %c0_12 = arith.constant 0 : index
      %13 = vector.load %arg9[%c0_11, %c0_12] : memref<1x512xf32, #tpu.memory_space<vmem>>, vector<1x512xf32>
      tpu.vector_store %arg9[%c0_11, %c0_12], %12 {strides = array<i32>} : memref<1x512xf32, #tpu.memory_space<vmem>>, vector<1x512xf32>,
    } else {
    }
    %c0 = arith.constant 0 : index
    %c0_1 = arith.constant 0 : index
    %3 = vector.load %arg9[%c0, %c0_1] : memref<1x512xf32, #tpu.memory_space<vmem>>, vector<1x512xf32>
    %c0_2 = arith.constant 0 : index
    %c0_3 = arith.constant 0 : index
    %4 = vector.load %arg1[%c0_2, %c0_3] : memref<1x384xbf16, #tpu.memory_space<vmem>>, vector<1x384xbf16>
    %c0_4 = arith.constant 0 : index
    %c0_5 = arith.constant 0 : index
    %5 = vector.load %arg2[%c0_4, %c0_5] : memref<384x512xbf16, #tpu.memory_space<vmem>>, vector<384x512xbf16>
    %cst = arith.constant dense<0.000000e+00> : vector<1x512xf32>
    %6 = tpu.matmul %4, %5, %cst {dimension_numbers = #tpu.dot_dimension_numbers<[1], [0], [0], [1], [0, 0, 1, 1], [], []>} : vector<1x384xbf16>, vector<384x512xbf16>, vector<1x512xf32> -> vector<1x512xf32>
    %7 = arith.addf %3, %6 : vector<1x512xf32>
    %c0_6 = arith.constant 0 : index
    %c0_7 = arith.constant 0 : index
    %8 = vector.load %arg9[%c0_6, %c0_7] : memref<1x512xf32, #tpu.memory_space<vmem>>, vector<1x512xf32>
    tpu.vector_store %arg9[%c0_6, %c0_7], %7 {strides = array<i32>} : memref<1x512xf32, #tpu.memory_space<vmem>>, vector<1x512xf32>,
    %c0_i32_8 = arith.constant 0 : i32
    %9 = arith.cmpi eq, %arg0, %c0_i32_8 : i32
    %10 = arith.extui %9 : i1 to i32
    %c0_i32_9 = arith.constant 0 : i32
    %11 = arith.cmpi ne, %10, %c0_i32_9 : i32
    scf.if %11 {
      %c0_10 = arith.constant 0 : index
      %c0_11 = arith.constant 0 : index
      %12 = vector.load %arg9[%c0_10, %c0_11] : memref<1x512xf32, #tpu.memory_space<vmem>>, vector<1x512xf32>
      %c0_12 = arith.constant 0 : index
      %c0_13 = arith.constant 0 : index
      %13 = vector.load %arg3[%c0_12, %c0_13] : memref<1x512xf32, #tpu.memory_space<vmem>>, vector<1x512xf32>
      %14 = arith.addf %12, %13 : vector<1x512xf32>
      %15 = vector.extract_strided_slice %14 {offsets = [0, 0], sizes = [1, 128], strides = [1, 1]} : vector<1x512xf32> to vector<1x128xf32>
      %16 = arith.negf %15 : vector<1x128xf32>
      %17 = math.exp %16 : vector<1x128xf32>
      %cst_14 = arith.constant 1.000000e+00 : f32
      %18 = vector.broadcast %cst_14 : f32 to vector<1x128xf32>
      %19 = arith.addf %18, %17 : vector<1x128xf32>
      %20 = arith.divf %18, %19 : vector<1x128xf32>
      %21 = vector.extract_strided_slice %14 {offsets = [0, 256], sizes = [1, 128], strides = [1, 1]} : vector<1x512xf32> to vector<1x128xf32>
      %22 = math.tanh %21 : vector<1x128xf32>
      %23 = vector.extract_strided_slice %14 {offsets = [0, 384], sizes = [1, 128], strides = [1, 1]} : vector<1x512xf32> to vector<1x128xf32>
      %24 = arith.negf %23 : vector<1x128xf32>
      %25 = math.exp %24 : vector<1x128xf32>
      %cst_15 = arith.constant 1.000000e+00 : f32
      %26 = vector.broadcast %cst_15 : f32 to vector<1x128xf32>
      %27 = arith.addf %26, %25 : vector<1x128xf32>
      %28 = arith.divf %26, %27 : vector<1x128xf32>
      %29 = arith.mulf %20, %22 : vector<1x128xf32>
      %30 = math.tanh %29 : vector<1x128xf32>
      %31 = arith.mulf %28, %30 : vector<1x128xf32>
      %32 = arith.truncf %31 : vector<1x128xf32> to vector<1x128xbf16>
      %c0_16 = arith.constant 0 : index
      %c0_17 = arith.constant 0 : index
      %33 = vector.load %arg4[%c0_16, %c0_17] : memref<128x256xbf16, #tpu.memory_space<vmem>>, vector<128x256xbf16>
      %cst_18 = arith.constant dense<0.000000e+00> : vector<1x256xf32>
      %34 = tpu.matmul %32, %33, %cst_18 {dimension_numbers = #tpu.dot_dimension_numbers<[1], [0], [0], [1], [0, 0, 1, 1], [], []>} : vector<1x128xbf16>, vector<128x256xbf16>, vector<1x256xf32> -> vector<1x256xf32>
      %c0_19 = arith.constant 0 : index
      %c0_20 = arith.constant 0 : index
      %35 = vector.load %arg5[%c0_19, %c0_20] : memref<1x256xf32, #tpu.memory_space<vmem>>, vector<1x256xf32>
      %36 = arith.addf %34, %35 : vector<1x256xf32>
      %cst_21 = arith.constant 0.000000e+00 : f32
      %37 = vector.broadcast %cst_21 : f32 to vector<1x256xf32>
      %38 = arith.maximumf %36, %37 : vector<1x256xf32>
      %39 = arith.truncf %38 : vector<1x256xf32> to vector<1x256xbf16>
      %c0_22 = arith.constant 0 : index
      %c0_23 = arith.constant 0 : index
      %40 = vector.load %arg7[%c0_22, %c0_23] : memref<4x128xf32, #tpu.memory_space<vmem>>, vector<4x128xf32>
      %c0_24 = arith.constant 0 : index
      %c0_25 = arith.constant 0 : index
      %c0_26 = arith.constant 0 : index
      %41 = vector.load %arg6[%c0_24, %c0_25, %c0_26] : memref<4x256x128xbf16, #tpu.memory_space<vmem>>, vector<1x256x128xbf16>
      %42 = vector.shape_cast %41 : vector<1x256x128xbf16> to vector<256x128xbf16>
      %cst_27 = arith.constant dense<0.000000e+00> : vector<1x128xf32>
      %43 = tpu.matmul %39, %42, %cst_27 {dimension_numbers = #tpu.dot_dimension_numbers<[1], [0], [0], [1], [0, 0, 1, 1], [], []>} : vector<1x256xbf16>, vector<256x128xbf16>, vector<1x128xf32> -> vector<1x128xf32>
      %44 = vector.extract_strided_slice %40 {offsets = [0, 0], sizes = [1, 128], strides = [1, 1]} : vector<4x128xf32> to vector<1x128xf32>
      %45 = arith.addf %43, %44 : vector<1x128xf32>
      %cst_28 = arith.constant dense<0xFF800000> : vector<1xf32>
      %46 = vector.multi_reduction <maximumf>, %45, %cst_28 [1] : vector<1x128xf32> to vector<1xf32>
      %47 = vector.shape_cast %46 : vector<1xf32> to vector<1x1xf32>
      %48 = vector.broadcast %47 : vector<1x1xf32> to vector<1x128xf32>
      %49 = arith.subf %45, %48 : vector<1x128xf32>
      %50 = math.exp %49 : vector<1x128xf32>
      %cst_29 = arith.constant dense<0.000000e+00> : vector<1xf32>
      %51 = vector.multi_reduction <add>, %50, %cst_29 [1] : vector<1x128xf32> to vector<1xf32>
      %52 = vector.shape_cast %51 : vector<1xf32> to vector<1x1xf32>
      %53 = vector.broadcast %52 : vector<1x1xf32> to vector<1x128xf32>
      %54 = arith.divf %50, %53 : vector<1x128xf32>
      %c0_30 = arith.constant 0 : index
      %c0_31 = arith.constant 0 : index
      %55 = vector.load %arg8[%c0_30, %c0_31] : memref<4x128xf32, #tpu.memory_space<vmem>>, vector<1x128xf32>
      tpu.vector_store %arg8[%c0_30, %c0_31], %54 {strides = array<i32>} : memref<4x128xf32, #tpu.memory_space<vmem>>, vector<1x128xf32>,
      %c1 = arith.constant 1 : index
      %c0_32 = arith.constant 0 : index
      %c0_33 = arith.constant 0 : index
      %56 = vector.load %arg6[%c1, %c0_32, %c0_33] : memref<4x256x128xbf16, #tpu.memory_space<vmem>>, vector<1x256x128xbf16>
      %57 = vector.shape_cast %56 : vector<1x256x128xbf16> to vector<256x128xbf16>
      %cst_34 = arith.constant dense<0.000000e+00> : vector<1x128xf32>
      %58 = tpu.matmul %39, %57, %cst_34 {dimension_numbers = #tpu.dot_dimension_numbers<[1], [0], [0], [1], [0, 0, 1, 1], [], []>} : vector<1x256xbf16>, vector<256x128xbf16>, vector<1x128xf32> -> vector<1x128xf32>
      %59 = vector.extract_strided_slice %40 {offsets = [1, 0], sizes = [1, 128], strides = [1, 1]} : vector<4x128xf32> to vector<1x128xf32>
      %60 = arith.addf %58, %59 : vector<1x128xf32>
      %cst_35 = arith.constant dense<0xFF800000> : vector<1xf32>
      %61 = vector.multi_reduction <maximumf>, %60, %cst_35 [1] : vector<1x128xf32> to vector<1xf32>
      %62 = vector.shape_cast %61 : vector<1xf32> to vector<1x1xf32>
      %63 = vector.broadcast %62 : vector<1x1xf32> to vector<1x128xf32>
      %64 = arith.subf %60, %63 : vector<1x128xf32>
      %65 = math.exp %64 : vector<1x128xf32>
      %cst_36 = arith.constant dense<0.000000e+00> : vector<1xf32>
      %66 = vector.multi_reduction <add>, %65, %cst_36 [1] : vector<1x128xf32> to vector<1xf32>
      %67 = vector.shape_cast %66 : vector<1xf32> to vector<1x1xf32>
      %68 = vector.broadcast %67 : vector<1x1xf32> to vector<1x128xf32>
      %69 = arith.divf %65, %68 : vector<1x128xf32>
      %c1_37 = arith.constant 1 : index
      %c0_38 = arith.constant 0 : index
      %70 = vector.load %arg8[%c1_37, %c0_38] : memref<4x128xf32, #tpu.memory_space<vmem>>, vector<1x128xf32>
      tpu.vector_store %arg8[%c1_37, %c0_38], %69 {strides = array<i32>} : memref<4x128xf32, #tpu.memory_space<vmem>>, vector<1x128xf32>,
      %c2 = arith.constant 2 : index
      %c0_39 = arith.constant 0 : index
      %c0_40 = arith.constant 0 : index
      %71 = vector.load %arg6[%c2, %c0_39, %c0_40] : memref<4x256x128xbf16, #tpu.memory_space<vmem>>, vector<1x256x128xbf16>
      %72 = vector.shape_cast %71 : vector<1x256x128xbf16> to vector<256x128xbf16>
      %cst_41 = arith.constant dense<0.000000e+00> : vector<1x128xf32>
      %73 = tpu.matmul %39, %72, %cst_41 {dimension_numbers = #tpu.dot_dimension_numbers<[1], [0], [0], [1], [0, 0, 1, 1], [], []>} : vector<1x256xbf16>, vector<256x128xbf16>, vector<1x128xf32> -> vector<1x128xf32>
      %74 = vector.extract_strided_slice %40 {offsets = [2, 0], sizes = [1, 128], strides = [1, 1]} : vector<4x128xf32> to vector<1x128xf32>
      %75 = arith.addf %73, %74 : vector<1x128xf32>
      %cst_42 = arith.constant dense<0xFF800000> : vector<1xf32>
      %76 = vector.multi_reduction <maximumf>, %75, %cst_42 [1] : vector<1x128xf32> to vector<1xf32>
      %77 = vector.shape_cast %76 : vector<1xf32> to vector<1x1xf32>
      %78 = vector.broadcast %77 : vector<1x1xf32> to vector<1x128xf32>
      %79 = arith.subf %75, %78 : vector<1x128xf32>
      %80 = math.exp %79 : vector<1x128xf32>
      %cst_43 = arith.constant dense<0.000000e+00> : vector<1xf32>
      %81 = vector.multi_reduction <add>, %80, %cst_43 [1] : vector<1x128xf32> to vector<1xf32>
      %82 = vector.shape_cast %81 : vector<1xf32> to vector<1x1xf32>
      %83 = vector.broadcast %82 : vector<1x1xf32> to vector<1x128xf32>
      %84 = arith.divf %80, %83 : vector<1x128xf32>
      %c2_44 = arith.constant 2 : index
      %c0_45 = arith.constant 0 : index
      %85 = vector.load %arg8[%c2_44, %c0_45] : memref<4x128xf32, #tpu.memory_space<vmem>>, vector<1x128xf32>
      tpu.vector_store %arg8[%c2_44, %c0_45], %84 {strides = array<i32>} : memref<4x128xf32, #tpu.memory_space<vmem>>, vector<1x128xf32>,
      %c3 = arith.constant 3 : index
      %c0_46 = arith.constant 0 : index
      %c0_47 = arith.constant 0 : index
      %86 = vector.load %arg6[%c3, %c0_46, %c0_47] : memref<4x256x128xbf16, #tpu.memory_space<vmem>>, vector<1x256x128xbf16>
      %87 = vector.shape_cast %86 : vector<1x256x128xbf16> to vector<256x128xbf16>
      %cst_48 = arith.constant dense<0.000000e+00> : vector<1x128xf32>
      %88 = tpu.matmul %39, %87, %cst_48 {dimension_numbers = #tpu.dot_dimension_numbers<[1], [0], [0], [1], [0, 0, 1, 1], [], []>} : vector<1x256xbf16>, vector<256x128xbf16>, vector<1x128xf32> -> vector<1x128xf32>
      %89 = vector.extract_strided_slice %40 {offsets = [3, 0], sizes = [1, 128], strides = [1, 1]} : vector<4x128xf32> to vector<1x128xf32>
      %90 = arith.addf %88, %89 : vector<1x128xf32>
      %cst_49 = arith.constant dense<0xFF800000> : vector<1xf32>
      %91 = vector.multi_reduction <maximumf>, %90, %cst_49 [1] : vector<1x128xf32> to vector<1xf32>
      %92 = vector.shape_cast %91 : vector<1xf32> to vector<1x1xf32>
      %93 = vector.broadcast %92 : vector<1x1xf32> to vector<1x128xf32>
      %94 = arith.subf %90, %93 : vector<1x128xf32>
      %95 = math.exp %94 : vector<1x128xf32>
      %cst_50 = arith.constant dense<0.000000e+00> : vector<1xf32>
      %96 = vector.multi_reduction <add>, %95, %cst_50 [1] : vector<1x128xf32> to vector<1xf32>
      %97 = vector.shape_cast %96 : vector<1xf32> to vector<1x1xf32>
      %98 = vector.broadcast %97 : vector<1x1xf32> to vector<1x128xf32>
      %99 = arith.divf %95, %98 : vector<1x128xf32>
      %c3_51 = arith.constant 3 : index
      %c0_52 = arith.constant 0 : index
      %100 = vector.load %arg8[%c3_51, %c0_52] : memref<4x128xf32, #tpu.memory_space<vmem>>, vector<1x128xf32>
      tpu.vector_store %arg8[%c3_51, %c0_52], %99 {strides = array<i32>} : memref<4x128xf32, #tpu.memory_space<vmem>>, vector<1x128xf32>,
    } else {
    }
    return
  }
  func.func @transform_0(%arg0: i32) -> (i32, i32) {
    %c0_i32 = arith.constant 0 : i32
    %c0_i32_0 = arith.constant 0 : i32
    return %c0_i32, %arg0 : i32, i32
  }
  func.func @transform_1(%arg0: i32) -> (i32, i32) {
    %c0_i32 = arith.constant 0 : i32
    %c0_i32_0 = arith.constant 0 : i32
    return %arg0, %c0_i32 : i32, i32
  }
  func.func @transform_2(%arg0: i32) -> (i32, i32) {
    %c0_i32 = arith.constant 0 : i32
    %c0_i32_0 = arith.constant 0 : i32
    %c0_i32_1 = arith.constant 0 : i32
    return %c0_i32, %c0_i32_0 : i32, i32
  }
  func.func @transform_3(%arg0: i32) -> (i32, i32) {
    %c0_i32 = arith.constant 0 : i32
    %c0_i32_0 = arith.constant 0 : i32
    %c0_i32_1 = arith.constant 0 : i32
    return %c0_i32, %c0_i32_0 : i32, i32
  }
  func.func @transform_4(%arg0: i32) -> (i32, i32) {
    %c0_i32 = arith.constant 0 : i32
    %c0_i32_0 = arith.constant 0 : i32
    %c0_i32_1 = arith.constant 0 : i32
    return %c0_i32, %c0_i32_0 : i32, i32
  }
  func.func @transform_5(%arg0: i32) -> (i32, i32, i32) {
    %c0_i32 = arith.constant 0 : i32
    %c0_i32_0 = arith.constant 0 : i32
    %c0_i32_1 = arith.constant 0 : i32
    %c0_i32_2 = arith.constant 0 : i32
    return %c0_i32, %c0_i32_0, %c0_i32_1 : i32, i32, i32
  }
  func.func @transform_6(%arg0: i32) -> (i32, i32) {
    %c0_i32 = arith.constant 0 : i32
    %c0_i32_0 = arith.constant 0 : i32
    %c0_i32_1 = arith.constant 0 : i32
    return %c0_i32, %c0_i32_0 : i32, i32
  }
  func.func @transform_7(%arg0: i32) -> (i32, i32) {
    %c0_i32 = arith.constant 0 : i32
    %c0_i32_0 = arith.constant 0 : i32
    %c0_i32_1 = arith.constant 0 : i32
    return %c0_i32, %c0_i32_0 : i32, i32
  }
}

</mosaic_0001>

<llo_original>
// kernel: forward.1
$region0: #{forward.1}
  #allocation0 [shape = 'u32[]', space=smem, size = 0x4, offset = 0x4, fixed_abs, tag = 'smem constant byte address 0x4 - core index']
  #allocation1 [shape = 'u32[144,128]{1,0:T(1,128)}', space=vmem, size = 0x12000, scoped, tag = 'internal scratch']
  #allocation2 [shape = 'f32[1,512]{1,0:T(1,128)}', space=vmem, size = 0x800, scoped, tag = 'scratch operand']
  %s0 = inlined_call_operand.vmem [shape: bf16[1,384], index: 0, kind: input, shape index: {}]
  %s1 = inlined_call_operand.hbm [shape: bf16[384,512], index: 1, kind: input, shape index: {}]
  %s2 = inlined_call_operand.vmem [shape: f32[1,512], index: 2, kind: input, shape index: {}]
  %s3 = inlined_call_operand.hbm [shape: bf16[128,256], index: 3, kind: input, shape index: {}]
  %s4 = inlined_call_operand.vmem [shape: f32[1,256], index: 4, kind: input, shape index: {}]
  %s5 = inlined_call_operand.hbm [shape: bf16[4,256,128], index: 5, kind: input, shape index: {}]
  %s6 = inlined_call_operand.vmem [shape: f32[4,128], index: 6, kind: input, shape index: {}]
  %s7 = inlined_call_operand.hbm [shape: f32[4,128], index: 7, kind: output, shape index: {}]
  %s8 = sld [smem:[#allocation0]]
  $region58: #{forward.1} parent=0
    _
  %s10 = ssub.s32 1, %s8
  %s11 = scalar_select 0, %s10, %s8
  $region1: #{forward.1} parent=0
    #allocation3 [shape = 'u8[393216]{0}', space=vmem, size = 0x60000, scoped, tag = 'input window, operand 1, single buffered']
    #allocation4 [shape = 's32[1]{0}', space=sflag, size = 0x4, scoped, tag = 'scoped memory for forward.1']
    #allocation5 [shape = 's32[1]{0}', space=sflag, size = 0x4, scoped, tag = 'scoped memory for forward.1']
    #allocation6 [shape = 'u8[65536]{0}', space=vmem, size = 0x10000, scoped, tag = 'input window, operand 3, single buffered']
    #allocation7 [shape = 's32[1]{0}', space=sflag, size = 0x4, scoped, tag = 'scoped memory for forward.1']
    #allocation8 [shape = 'u8[262144]{0}', space=vmem, size = 0x40000, scoped, tag = 'input window, operand 5, single buffered']
    #allocation9 [shape = 'u8[2048]{0}', space=vmem, size = 0x800, scoped, tag = 'output window, operand 0, single buffered']
    %12 = vsyncpa [#allocation4], 0
    %13 = vsyncpa [#allocation7], 0
    %14 = vsyncpa [#allocation5], 0
    // Predicated region
    $region2: #{forward.1} parent=1 // pred_check
      _
    $region3: #{forward.1} parent=1 // pred_check_branch
      %16 = sbr.rel (0) target = $region5
    $region4: #{forward.1} parent=1 // pred_region
      _
    $region5: #{forward.1} parent=1 // pred_fallthru
      _
    // Predicated region
    $region6: #{forward.1} parent=1 // pred_check
      _
    $region7: #{forward.1} parent=1 // pred_check_branch
      %18 = sbr.rel (0) target = $region9
    $region8: #{forward.1} parent=1 // pred_region
      %s20 = ssub.s32 12288, 12288
      %21 = vsyncadd [#allocation4], %s20
      %s22 = sshll.u32 [#allocation3], 4
      %s23 = int_to_ptr.vmem [resolvable:$true] %s22
      %28 = dma.hbm_to_vmem [thread:$0]  %s1, 12288, %s23, [#allocation4], 256, 256, 16
    $region9: #{forward.1} parent=1 // pred_fallthru
      _
    // Predicated region
    $region10: #{forward.1} parent=1 // pred_check
      _
    $region11: #{forward.1} parent=1 // pred_check_branch
      %30 = sbr.rel (0) target = $region13
    $region12: #{forward.1} parent=1 // pred_region
      _
    $region13: #{forward.1} parent=1 // pred_fallthru
      _
    // Predicated region
    $region14: #{forward.1} parent=1 // pred_check
      _
    $region15: #{forward.1} parent=1 // pred_check_branch
      %32 = sbr.rel (0) target = $region17
    $region16: #{forward.1} parent=1 // pred_region
      %s34 = ssub.s32 2048, 2048
      %35 = vsyncadd [#allocation7], %s34
      %s36 = sshll.u32 [#allocation6], 4
      %s37 = int_to_ptr.vmem [resolvable:$true] %s36
      %42 = dma.hbm_to_vmem [thread:$0]  %s3, 2048, %s37, [#allocation7], 128, 128, 8
    $region17: #{forward.1} parent=1 // pred_fallthru
      _
    // Predicated region
    $region18: #{forward.1} parent=1 // pred_check
      _
    $region19: #{forward.1} parent=1 // pred_check_branch
      %44 = sbr.rel (0) target = $region21
    $region20: #{forward.1} parent=1 // pred_region
      _
    $region21: #{forward.1} parent=1 // pred_fallthru
      _
    // Predicated region
    $region22: #{forward.1} parent=1 // pred_check
      _
    $region23: #{forward.1} parent=1 // pred_check_branch
      %46 = sbr.rel (0) target = $region25
    $region24: #{forward.1} parent=1 // pred_region
      %s48 = ssub.s32 8192, 8192
      %49 = vsyncadd [#allocation7], %s48
      %s50 = sshll.u32 [#allocation8], 4
      %s51 = int_to_ptr.vmem [resolvable:$true] %s50
      %56 = dma.hbm_to_vmem [thread:$0]  %s5, 8192, %s51, [#allocation7], 64, 64, 4
    $region25: #{forward.1} parent=1 // pred_fallthru
      _
    // Predicated region
    $region26: #{forward.1} parent=1 // pred_check
      _
    $region27: #{forward.1} parent=1 // pred_check_branch
      %58 = sbr.rel (0) target = $region29
    $region28: #{forward.1} parent=1 // pred_region
      _
    $region29: #{forward.1} parent=1 // pred_fallthru
      _
    // Predicated region
    $region30: #{forward.1} parent=1 // pred_check
      _
    $region31: #{forward.1} parent=1 // pred_check_branch
      %60 = sbr.rel (0) target = $region33
    $region32: #{forward.1} parent=1 // pred_region
      %61 = dma.done [#allocation4], 12288
    $region33: #{forward.1} parent=1 // pred_fallthru
      _
    // Predicated region
    $region34: #{forward.1} parent=1 // pred_check
      _
    $region35: #{forward.1} parent=1 // pred_check_branch
      %63 = sbr.rel (0) target = $region37
    $region36: #{forward.1} parent=1 // pred_region
      %64 = dma.done [#allocation7], 2048
    $region37: #{forward.1} parent=1 // pred_fallthru
      _
    // Predicated region
    $region38: #{forward.1} parent=1 // pred_check
      _
    $region39: #{forward.1} parent=1 // pred_check_branch
      %66 = sbr.rel (0) target = $region41
    $region40: #{forward.1} parent=1 // pred_region
      %67 = dma.done [#allocation7], 8192
    $region41: #{forward.1} parent=1 // pred_fallthru
      _
    %p69 = scmp.eq.s32.totalorder 0, 0
    // Predicated region
    $region42: #{forward.1} parent=1 // pred_check
      %p70 = pneg %p69
    $region43: #{forward.1} parent=1 // pred_check_branch
      %72 = sbr.rel (%p70) target = $region45
    $region44: #{forward.1} parent=1 // pred_region
      %v73 = vlaneseq
      %vm74 = vcmp.ge.s32.totalorder %v73, 0
      %vm75 = vcmp.lt.s32.totalorder %v73, 512
      %vm76 = vmand %vm74, %vm75
      %77 = vst.msk [vmem:[#allocation2] sm:$0xf] %vm76, 0.0
    $region45: #{forward.1} parent=1 // pred_fallthru
      _
    %v78 = vld [vmem:[#allocation2] sm:$0xf]
    %v79 = vld [vmem:[%s0] sm:$0x7]
    %v80 = vld [vmem:[#allocation3] sm:$0xff]
    %v81 = vld [vmem:[#allocation3 + $0x8] sm:$0xff]
    %v82 = vld [vmem:[#allocation3 + $0x10] sm:$0xff]
    %v83 = vld [vmem:[#allocation3 + $0x18] sm:$0xff]
    %v84 = vld [vmem:[#allocation3 + $0x20] sm:$0xff]
    %v85 = vld [vmem:[#allocation3 + $0x28] sm:$0xff]
    %v86 = vld [vmem:[#allocation3 + $0x30] sm:$0xff]
    %v87 = vld [vmem:[#allocation3 + $0x38] sm:$0xff]
    %v88 = vld [vmem:[#allocation3 + $0x40] sm:$0xff]
    %v89 = vld [vmem:[#allocation3 + $0x48] sm:$0xff]
    %v90 = vld [vmem:[#allocation3 + $0x50] sm:$0xff]
    %v91 = vld [vmem:[#allocation3 + $0x58] sm:$0xff]
    %v92 = vld [vmem:[#allocation3 + $0x60] sm:$0xff]
    %v93 = vld [vmem:[#allocation3 + $0x68] sm:$0xff]
    %v94 = vld [vmem:[#allocation3 + $0x70] sm:$0xff]
    %v95 = vld [vmem:[#allocation3 + $0x78] sm:$0xff]
    %v96 = vld [vmem:[#allocation3 + $0x80] sm:$0xff]
    %v97 = vld [vmem:[#allocation3 + $0x88] sm:$0xff]
    %v98 = vld [vmem:[#allocation3 + $0x90] sm:$0xff]
    %v99 = vld [vmem:[#allocation3 + $0x98] sm:$0xff]
    %v100 = vld [vmem:[#allocation3 + $0xa0] sm:$0xff]
    %v101 = vld [vmem:[#allocation3 + $0xa8] sm:$0xff]
    %v102 = vld [vmem:[#allocation3 + $0xb0] sm:$0xff]
    %v103 = vld [vmem:[#allocation3 + $0xb8] sm:$0xff]
    %v104 = vld [vmem:[#allocation3 + $0xc0] sm:$0xff]
    %v105 = vld [vmem:[#allocation3 + $0xc8] sm:$0xff]
    %v106 = vld [vmem:[#allocation3 + $0xd0] sm:$0xff]
    %v107 = vld [vmem:[#allocation3 + $0xd8] sm:$0xff]
    %v108 = vld [vmem:[#allocation3 + $0xe0] sm:$0xff]
    %v109 = vld [vmem:[#allocation3 + $0xe8] sm:$0xff]
    %v110 = vld [vmem:[#allocation3 + $0xf0] sm:$0xff]
    %v111 = vld [vmem:[#allocation3 + $0xf8] sm:$0xff]
    %v112 = vld [vmem:[#allocation3 + $0x100] sm:$0xff]
    %v113 = vld [vmem:[#allocation3 + $0x108] sm:$0xff]
    %v114 = vld [vmem:[#allocation3 + $0x110] sm:$0xff]
    %v115 = vld [vmem:[#allocation3 + $0x118] sm:$0xff]
    %v116 = vld [vmem:[#allocation3 + $0x120] sm:$0xff]
    %v117 = vld [vmem:[#allocation3 + $0x128] sm:$0xff]
    %v118 = vld [vmem:[#allocation3 + $0x130] sm:$0xff]
    %v119 = vld [vmem:[#allocation3 + $0x138] sm:$0xff]
    %v120 = vld [vmem:[#allocation3 + $0x140] sm:$0xff]
    %v121 = vld [vmem:[#allocation3 + $0x148] sm:$0xff]
    %v122 = vld [vmem:[#allocation3 + $0x150] sm:$0xff]
    %v123 = vld [vmem:[#allocation3 + $0x158] sm:$0xff]
    %v124 = vld [vmem:[#allocation3 + $0x160] sm:$0xff]
    %v125 = vld [vmem:[#allocation3 + $0x168] sm:$0xff]
    %v126 = vld [vmem:[#allocation3 + $0x170] sm:$0xff]
    %v127 = vld [vmem:[#allocation3 + $0x178] sm:$0xff]
    %v128 = vld [vmem:[#allocation3 + $0x180] sm:$0xff]
    %v129 = vld [vmem:[#allocation3 + $0x188] sm:$0xff]
    %v130 = vld [vmem:[#allocation3 + $0x190] sm:$0xff]
    %v131 = vld [vmem:[#allocation3 + $0x198] sm:$0xff]
    %v132 = vld [vmem:[#allocation3 + $0x1a0] sm:$0xff]
    %v133 = vld [vmem:[#allocation3 + $0x1a8] sm:$0xff]
    %v134 = vld [vmem:[#allocation3 + $0x1b0] sm:$0xff]
    %v135 = vld [vmem:[#allocation3 + $0x1b8] sm:$0xff]
    %v136 = vld [vmem:[#allocation3 + $0x1c0] sm:$0xff]
    %v137 = vld [vmem:[#allocation3 + $0x1c8] sm:$0xff]
    %v138 = vld [vmem:[#allocation3 + $0x1d0] sm:$0xff]
    %v139 = vld [vmem:[#allocation3 + $0x1d8] sm:$0xff]
    %v140 = vld [vmem:[#allocation3 + $0x1e0] sm:$0xff]
    %v141 = vld [vmem:[#allocation3 + $0x1e8] sm:$0xff]
    %v142 = vld [vmem:[#allocation3 + $0x1f0] sm:$0xff]
    %v143 = vld [vmem:[#allocation3 + $0x1f8] sm:$0xff]
    %v144 = vld [vmem:[#allocation3 + $0x200] sm:$0xff]
    %v145 = vld [vmem:[#allocation3 + $0x208] sm:$0xff]
    %v146 = vld [vmem:[#allocation3 + $0x210] sm:$0xff]
    %v147 = vld [vmem:[#allocation3 + $0x218] sm:$0xff]
    %v148 = vld [vmem:[#allocation3 + $0x220] sm:$0xff]
    %v149 = vld [vmem:[#allocation3 + $0x228] sm:$0xff]
    %v150 = vld [vmem:[#allocation3 + $0x230] sm:$0xff]
    %v151 = vld [vmem:[#allocation3 + $0x238] sm:$0xff]
    %v152 = vld [vmem:[#allocation3 + $0x240] sm:$0xff]
    %v153 = vld [vmem:[#allocation3 + $0x248] sm:$0xff]
    %v154 = vld [vmem:[#allocation3 + $0x250] sm:$0xff]
    %v155 = vld [vmem:[#allocation3 + $0x258] sm:$0xff]
    %v156 = vld [vmem:[#allocation3 + $0x260] sm:$0xff]
    %v157 = vld [vmem:[#allocation3 + $0x268] sm:$0xff]
    %v158 = vld [vmem:[#allocation3 + $0x270] sm:$0xff]
    %v159 = vld [vmem:[#allocation3 + $0x278] sm:$0xff]
    %v160 = vld [vmem:[#allocation3 + $0x280] sm:$0xff]
    %v161 = vld [vmem:[#allocation3 + $0x288] sm:$0xff]
    %v162 = vld [vmem:[#allocation3 + $0x290] sm:$0xff]
    %v163 = vld [vmem:[#allocation3 + $0x298] sm:$0xff]
    %v164 = vld [vmem:[#allocation3 + $0x2a0] sm:$0xff]
    %v165 = vld [vmem:[#allocation3 + $0x2a8] sm:$0xff]
    %v166 = vld [vmem:[#allocation3 + $0x2b0] sm:$0xff]
    %v167 = vld [vmem:[#allocation3 + $0x2b8] sm:$0xff]
    %v168 = vld [vmem:[#allocation3 + $0x2c0] sm:$0xff]
    %v169 = vld [vmem:[#allocation3 + $0x2c8] sm:$0xff]
    %v170 = vld [vmem:[#allocation3 + $0x2d0] sm:$0xff]
    %v171 = vld [vmem:[#allocation3 + $0x2d8] sm:$0xff]
    %v172 = vld [vmem:[#allocation3 + $0x2e0] sm:$0xff]
    %v173 = vld [vmem:[#allocation3 + $0x2e8] sm:$0xff]
    %v174 = vld [vmem:[#allocation3 + $0x2f0] sm:$0xff]
    %v175 = vld [vmem:[#allocation3 + $0x2f8] sm:$0xff]
    %v178 = vunpack.c.l.s4 1966171168
    %v179 = vunpack.c.0.s8 %v178
    %v180 = vlaneseq
    %v181 = vshrl.u32 %v180, 7
    %v182 = vsub.s32 %v179, %v181
    %v183 = vrot.slane %v79, %v182
    %v184 = vcombine.high %v183, %v183
    %v186 = vunpack.c.l.s4 1966171168
    %v187 = vunpack.c.0.s8 %v186
    %v188 = vlaneseq
    %v189 = vshrl.u32 %v188, 7
    %v190 = vsub.s32 %v187, %v189
    %v191 = vrot.slane %v183, %v190
    %v193 = vunpack.c.l.s4 1966171168
    %v194 = vunpack.c.0.s8 %v193
    %v195 = vlaneseq
    %v196 = vshrl.u32 %v195, 7
    %v197 = vsub.s32 %v194, %v196
    %v198 = vrot.slane %v184, %v197
    %v199 = vcombine.high %v191, %v191
    %v299 = vunpack.c.l.b16 %v80
    %v300 = vunpack.c.h.b16 %v80
    %v301 = vunpack.c.l.b16 %v81
    %v302 = vunpack.c.h.b16 %v81
    %v303 = vunpack.c.l.b16 %v82
    %v304 = vunpack.c.h.b16 %v82
    %v305 = vunpack.c.l.b16 %v83
    %v306 = vunpack.c.h.b16 %v83
    %v307 = vunpack.c.l.b16 %v84
    %v308 = vunpack.c.h.b16 %v84
    %v309 = vunpack.c.l.b16 %v85
    %v310 = vunpack.c.h.b16 %v85
    %v311 = vunpack.c.l.b16 %v86
    %v312 = vunpack.c.h.b16 %v86
    %v313 = vunpack.c.l.b16 %v87
    %v314 = vunpack.c.h.b16 %v87
    %v315 = vunpack.c.l.b16 %v88
    %v316 = vunpack.c.h.b16 %v88
    %v317 = vunpack.c.l.b16 %v89
    %v318 = vunpack.c.h.b16 %v89
    %v319 = vunpack.c.l.b16 %v90
    %v320 = vunpack.c.h.b16 %v90
    %v321 = vunpack.c.l.b16 %v91
    %v322 = vunpack.c.h.b16 %v91
    %v323 = vunpack.c.l.b16 %v92
    %v324 = vunpack.c.h.b16 %v92
    %v325 = vunpack.c.l.b16 %v93
    %v326 = vunpack.c.h.b16 %v93
    %v327 = vunpack.c.l.b16 %v94
    %v328 = vunpack.c.h.b16 %v94
    %v329 = vunpack.c.l.b16 %v95
    %v330 = vunpack.c.h.b16 %v95
    %v331 = vunpack.c.l.b16 %v96
    %v332 = vunpack.c.h.b16 %v96
    %v333 = vunpack.c.l.b16 %v97
    %v334 = vunpack.c.h.b16 %v97
    %v335 = vunpack.c.l.b16 %v98
    %v336 = vunpack.c.h.b16 %v98
    %v337 = vunpack.c.l.b16 %v99
    %v338 = vunpack.c.h.b16 %v99
    %v339 = vunpack.c.l.b16 %v100
    %v340 = vunpack.c.h.b16 %v100
    %v341 = vunpack.c.l.b16 %v101
    %v342 = vunpack.c.h.b16 %v101
    %v343 = vunpack.c.l.b16 %v102
    %v344 = vunpack.c.h.b16 %v102
    %v345 = vunpack.c.l.b16 %v103
    %v346 = vunpack.c.h.b16 %v103
    %v347 = vunpack.c.l.b16 %v104
    %v348 = vunpack.c.h.b16 %v104
    %v349 = vunpack.c.l.b16 %v105
    %v350 = vunpack.c.h.b16 %v105
    %v351 = vunpack.c.l.b16 %v106
    %v352 = vunpack.c.h.b16 %v106
    %v353 = vunpack.c.l.b16 %v107
    %v354 = vunpack.c.h.b16 %v107
    %v355 = vunpack.c.l.b16 %v108
    %v356 = vunpack.c.h.b16 %v108
    %v357 = vunpack.c.l.b16 %v109
    %v358 = vunpack.c.h.b16 %v109
    %v359 = vunpack.c.l.b16 %v110
    %v360 = vunpack.c.h.b16 %v110
    %v361 = vunpack.c.l.b16 %v111
    %v362 = vunpack.c.h.b16 %v111
    %v363 = vunpack.c.l.b16 %v112
    %v364 = vunpack.c.h.b16 %v112
    %v365 = vunpack.c.l.b16 %v113
    %v366 = vunpack.c.h.b16 %v113
    %v367 = vunpack.c.l.b16 %v114
    %v368 = vunpack.c.h.b16 %v114
    %v369 = vunpack.c.l.b16 %v115
    %v370 = vunpack.c.h.b16 %v115
    %v371 = vunpack.c.l.b16 %v116
    %v372 = vunpack.c.h.b16 %v116
    %v373 = vunpack.c.l.b16 %v117
    %v374 = vunpack.c.h.b16 %v117
    %v375 = vunpack.c.l.b16 %v118
    %v376 = vunpack.c.h.b16 %v118
    %v377 = vunpack.c.l.b16 %v119
    %v378 = vunpack.c.h.b16 %v119
    %v379 = vunpack.c.l.b16 %v120
    %v380 = vunpack.c.h.b16 %v120
    %v381 = vunpack.c.l.b16 %v121
    %v382 = vunpack.c.h.b16 %v121
    %v383 = vunpack.c.l.b16 %v122
    %v384 = vunpack.c.h.b16 %v122
    %v385 = vunpack.c.l.b16 %v123
    %v386 = vunpack.c.h.b16 %v123
    %v387 = vunpack.c.l.b16 %v124
    %v388 = vunpack.c.h.b16 %v124
    %v389 = vunpack.c.l.b16 %v125
    %v390 = vunpack.c.h.b16 %v125
    %v391 = vunpack.c.l.b16 %v126
    %v392 = vunpack.c.h.b16 %v126
    %v393 = vunpack.c.l.b16 %v127
    %v394 = vunpack.c.h.b16 %v127
    %v395 = vunpack.c.l.b16 %v128
    %v396 = vunpack.c.h.b16 %v128
    %v397 = vunpack.c.l.b16 %v129
    %v398 = vunpack.c.h.b16 %v129
    %v399 = vunpack.c.l.b16 %v130
    %v400 = vunpack.c.h.b16 %v130
    %v401 = vunpack.c.l.b16 %v131
    %v402 = vunpack.c.h.b16 %v131
    %v403 = vunpack.c.l.b16 %v132
    %v404 = vunpack.c.h.b16 %v132
    %v405 = vunpack.c.l.b16 %v133
    %v406 = vunpack.c.h.b16 %v133
    %v407 = vunpack.c.l.b16 %v134
    %v408 = vunpack.c.h.b16 %v134
    %v409 = vunpack.c.l.b16 %v135
    %v410 = vunpack.c.h.b16 %v135
    %v411 = vunpack.c.l.b16 %v136
    %v412 = vunpack.c.h.b16 %v136
    %v413 = vunpack.c.l.b16 %v137
    %v414 = vunpack.c.h.b16 %v137
    %v415 = vunpack.c.l.b16 %v138
    %v416 = vunpack.c.h.b16 %v138
    %v417 = vunpack.c.l.b16 %v139
    %v418 = vunpack.c.h.b16 %v139
    %v419 = vunpack.c.l.b16 %v140
    %v420 = vunpack.c.h.b16 %v140
    %v421 = vunpack.c.l.b16 %v141
    %v422 = vunpack.c.h.b16 %v141
    %v423 = vunpack.c.l.b16 %v142
    %v424 = vunpack.c.h.b16 %v142
    %v425 = vunpack.c.l.b16 %v143
    %v426 = vunpack.c.h.b16 %v143
    %v427 = vunpack.c.l.b16 %v144
    %v428 = vunpack.c.h.b16 %v144
    %v429 = vunpack.c.l.b16 %v145
    %v430 = vunpack.c.h.b16 %v145
    %v431 = vunpack.c.l.b16 %v146
    %v432 = vunpack.c.h.b16 %v146
    %v433 = vunpack.c.l.b16 %v147
    %v434 = vunpack.c.h.b16 %v147
    %v435 = vunpack.c.l.b16 %v148
    %v436 = vunpack.c.h.b16 %v148
    %v437 = vunpack.c.l.b16 %v149
    %v438 = vunpack.c.h.b16 %v149
    %v439 = vunpack.c.l.b16 %v150
    %v440 = vunpack.c.h.b16 %v150
    %v441 = vunpack.c.l.b16 %v151
    %v442 = vunpack.c.h.b16 %v151
    %v443 = vunpack.c.l.b16 %v152
    %v444 = vunpack.c.h.b16 %v152
    %v445 = vunpack.c.l.b16 %v153
    %v446 = vunpack.c.h.b16 %v153
    %v447 = vunpack.c.l.b16 %v154
    %v448 = vunpack.c.h.b16 %v154
    %v449 = vunpack.c.l.b16 %v155
    %v450 = vunpack.c.h.b16 %v155
    %v451 = vunpack.c.l.b16 %v156
    %v452 = vunpack.c.h.b16 %v156
    %v453 = vunpack.c.l.b16 %v157
    %v454 = vunpack.c.h.b16 %v157
    %v455 = vunpack.c.l.b16 %v158
    %v456 = vunpack.c.h.b16 %v158
    %v457 = vunpack.c.l.b16 %v159
    %v458 = vunpack.c.h.b16 %v159
    %v459 = vunpack.c.l.b16 %v160
    %v460 = vunpack.c.h.b16 %v160
    %v461 = vunpack.c.l.b16 %v161
    %v462 = vunpack.c.h.b16 %v161
    %v463 = vunpack.c.l.b16 %v162
    %v464 = vunpack.c.h.b16 %v162
    %v465 = vunpack.c.l.b16 %v163
    %v466 = vunpack.c.h.b16 %v163
    %v467 = vunpack.c.l.b16 %v164
    %v468 = vunpack.c.h.b16 %v164
    %v469 = vunpack.c.l.b16 %v165
    %v470 = vunpack.c.h.b16 %v165
    %v471 = vunpack.c.l.b16 %v166
    %v472 = vunpack.c.h.b16 %v166
    %v473 = vunpack.c.l.b16 %v167
    %v474 = vunpack.c.h.b16 %v167
    %v475 = vunpack.c.l.b16 %v168
    %v476 = vunpack.c.h.b16 %v168
    %v477 = vunpack.c.l.b16 %v169
    %v478 = vunpack.c.h.b16 %v169
    %v479 = vunpack.c.l.b16 %v170
    %v480 = vunpack.c.h.b16 %v170
    %v481 = vunpack.c.l.b16 %v171
    %v482 = vunpack.c.h.b16 %v171
    %v483 = vunpack.c.l.b16 %v172
    %v484 = vunpack.c.h.b16 %v172
    %v485 = vunpack.c.l.b16 %v173
    %v486 = vunpack.c.h.b16 %v173
    %v487 = vunpack.c.l.b16 %v174
    %v488 = vunpack.c.h.b16 %v174
    %v489 = vunpack.c.l.b16 %v175
    %v490 = vunpack.c.h.b16 %v175
    %v491 = vpack.c.b16 %v303, %v299
    %v492 = vpack.c.b16 %v304, %v300
    %v493 = vpack.c.b16 %v305, %v301
    %v494 = vpack.c.b16 %v306, %v302
    %v495 = vpack.c.b16 %v311, %v307
    %v496 = vpack.c.b16 %v312, %v308
    %v497 = vpack.c.b16 %v313, %v309
    %v498 = vpack.c.b16 %v314, %v310
    %v499 = vpack.c.b16 %v319, %v315
    %v500 = vpack.c.b16 %v320, %v316
    %v501 = vpack.c.b16 %v321, %v317
    %v502 = vpack.c.b16 %v322, %v318
    %v503 = vpack.c.b16 %v327, %v323
    %v504 = vpack.c.b16 %v328, %v324
    %v505 = vpack.c.b16 %v329, %v325
    %v506 = vpack.c.b16 %v330, %v326
    %v507 = vpack.c.b16 %v335, %v331
    %v508 = vpack.c.b16 %v336, %v332
    %v509 = vpack.c.b16 %v337, %v333
    %v510 = vpack.c.b16 %v338, %v334
    %v511 = vpack.c.b16 %v343, %v339
    %v512 = vpack.c.b16 %v344, %v340
    %v513 = vpack.c.b16 %v345, %v341
    %v514 = vpack.c.b16 %v346, %v342
    %v515 = vpack.c.b16 %v351, %v347
    %v516 = vpack.c.b16 %v352, %v348
    %v517 = vpack.c.b16 %v353, %v349
    %v518 = vpack.c.b16 %v354, %v350
    %v519 = vpack.c.b16 %v359, %v355
    %v520 = vpack.c.b16 %v360, %v356
    %v521 = vpack.c.b16 %v361, %v357
    %v522 = vpack.c.b16 %v362, %v358
    %v523 = vpack.c.b16 %v367, %v363
    %v524 = vpack.c.b16 %v368, %v364
    %v525 = vpack.c.b16 %v369, %v365
    %v526 = vpack.c.b16 %v370, %v366
    %v527 = vpack.c.b16 %v375, %v371
    %v528 = vpack.c.b16 %v376, %v372
    %v529 = vpack.c.b16 %v377, %v373
    %v530 = vpack.c.b16 %v378, %v374
    %v531 = vpack.c.b16 %v383, %v379
    %v532 = vpack.c.b16 %v384, %v380
    %v533 = vpack.c.b16 %v385, %v381
    %v534 = vpack.c.b16 %v386, %v382
    %v535 = vpack.c.b16 %v391, %v387
    %v536 = vpack.c.b16 %v392, %v388
    %v537 = vpack.c.b16 %v393, %v389
    %v538 = vpack.c.b16 %v394, %v390
    %v539 = vpack.c.b16 %v399, %v395
    %v540 = vpack.c.b16 %v400, %v396
    %v541 = vpack.c.b16 %v401, %v397
    %v542 = vpack.c.b16 %v402, %v398
    %v543 = vpack.c.b16 %v407, %v403
    %v544 = vpack.c.b16 %v408, %v404
    %v545 = vpack.c.b16 %v409, %v405
    %v546 = vpack.c.b16 %v410, %v406
    %v547 = vpack.c.b16 %v415, %v411
    %v548 = vpack.c.b16 %v416, %v412
    %v549 = vpack.c.b16 %v417, %v413
    %v550 = vpack.c.b16 %v418, %v414
    %v551 = vpack.c.b16 %v423, %v419
    %v552 = vpack.c.b16 %v424, %v420
    %v553 = vpack.c.b16 %v425, %v421
    %v554 = vpack.c.b16 %v426, %v422
    %v555 = vpack.c.b16 %v431, %v427
    %v556 = vpack.c.b16 %v432, %v428
    %v557 = vpack.c.b16 %v433, %v429
    %v558 = vpack.c.b16 %v434, %v430
    %v559 = vpack.c.b16 %v439, %v435
    %v560 = vpack.c.b16 %v440, %v436
    %v561 = vpack.c.b16 %v441, %v437
    %v562 = vpack.c.b16 %v442, %v438
    %v563 = vpack.c.b16 %v447, %v443
    %v564 = vpack.c.b16 %v448, %v444
    %v565 = vpack.c.b16 %v449, %v445
    %v566 = vpack.c.b16 %v450, %v446
    %v567 = vpack.c.b16 %v455, %v451
    %v568 = vpack.c.b16 %v456, %v452
    %v569 = vpack.c.b16 %v457, %v453
    %v570 = vpack.c.b16 %v458, %v454
    %v571 = vpack.c.b16 %v463, %v459
    %v572 = vpack.c.b16 %v464, %v460
    %v573 = vpack.c.b16 %v465, %v461
    %v574 = vpack.c.b16 %v466, %v462
    %v575 = vpack.c.b16 %v471, %v467
    %v576 = vpack.c.b16 %v472, %v468
    %v577 = vpack.c.b16 %v473, %v469
    %v578 = vpack.c.b16 %v474, %v470
    %v579 = vpack.c.b16 %v479, %v475
    %v580 = vpack.c.b16 %v480, %v476
    %v581 = vpack.c.b16 %v481, %v477
    %v582 = vpack.c.b16 %v482, %v478
    %v583 = vpack.c.b16 %v487, %v483
    %v584 = vpack.c.b16 %v488, %v484
    %v585 = vpack.c.b16 %v489, %v485
    %v586 = vpack.c.b16 %v490, %v486
    %683 = vmatprep.subr.bf16.mxu0 %v492
    %684 = vmatpush1.bf16.msra.mxu0 %v491
    %685 = vmatprep.subr.bf16.mxu0 %v496
    %686 = vmatpush1.bf16.msra.mxu0 %v495
    %687 = vmatprep.subr.bf16.mxu0 %v500
    %688 = vmatpush1.bf16.msra.mxu0 %v499
    %689 = vmatprep.subr.bf16.mxu0 %v504
    %690 = vmatpush1.bf16.msra.mxu0 %v503
    %691 = vmatprep.subr.bf16.mxu0 %v508
    %692 = vmatpush1.bf16.msra.mxu0 %v507
    %693 = vmatprep.subr.bf16.mxu0 %v512
    %694 = vmatpush1.bf16.msra.mxu0 %v511
    %695 = vmatprep.subr.bf16.mxu0 %v516
    %696 = vmatpush1.bf16.msra.mxu0 %v515
    %697 = vmatprep.subr.bf16.mxu0 %v520
    %698 = vmatpush1.bf16.msra.mxu0 %v519
    %699 = vmatprep.subr.bf16.mxu0 %v524
    %700 = vmatpush1.bf16.msra.mxu0 %v523
    %701 = vmatprep.subr.bf16.mxu0 %v528
    %702 = vmatpush1.bf16.msra.mxu0 %v527
    %703 = vmatprep.subr.bf16.mxu0 %v532
    %704 = vmatpush1.bf16.msra.mxu0 %v531
    %705 = vmatprep.subr.bf16.mxu0 %v536
    %706 = vmatpush1.bf16.msra.mxu0 %v535
    %707 = vmatprep.subr.bf16.mxu0 %v540
    %708 = vmatpush1.bf16.msra.mxu0 %v539
    %709 = vmatprep.subr.bf16.mxu0 %v544
    %710 = vmatpush1.bf16.msra.mxu0 %v543
    %711 = vmatprep.subr.bf16.mxu0 %v548
    %712 = vmatpush1.bf16.msra.mxu0 %v547
    %713 = vmatprep.subr.bf16.mxu0 %v552
    %714 = vmatpush1.bf16.msra.mxu0 %v551
    %715 = vmatprep.mubr.bf16.mxu0 %v198
    %716 = vmatmul.mubr.bf16.gmra.mrb[0].mxu0 %v191
    %v717 = vpop.f32.mrb[0].mxu0
    %v718 = vadd.f32 0.0, %v717
    %v719 = vpop.f32.mrb[0].mxu0
    %v720 = vadd.f32 0.0, %v719
    %v721 = vpop.f32.mrb[0].mxu0
    %v722 = vpop.f32.mrb[0].mxu0
    %723 = vdwg.mxu0
    %724 = vmatprep.subr.bf16.mxu0 %v556
    %725 = vmatpush1.bf16.msra.mxu0 %v555
    %726 = vmatprep.subr.bf16.mxu0 %v560
    %727 = vmatpush1.bf16.msra.mxu0 %v559
    %728 = vmatprep.subr.bf16.mxu0 %v564
    %729 = vmatpush1.bf16.msra.mxu0 %v563
    %730 = vmatprep.subr.bf16.mxu0 %v568
    %731 = vmatpush1.bf16.msra.mxu0 %v567
    %732 = vmatprep.subr.bf16.mxu0 %v572
    %733 = vmatpush1.bf16.msra.mxu0 %v571
    %734 = vmatprep.subr.bf16.mxu0 %v576
    %735 = vmatpush1.bf16.msra.mxu0 %v575
    %736 = vmatprep.subr.bf16.mxu0 %v580
    %737 = vmatpush1.bf16.msra.mxu0 %v579
    %738 = vmatprep.subr.bf16.mxu0 %v584
    %739 = vmatpush1.bf16.msra.mxu0 %v583
    %740 = vmatprep.subr.bf16.mxu0 0
    %741 = vmatpush1.bf16.msra.mxu0 0
    %742 = vmatprep.subr.bf16.mxu0 0
    %743 = vmatpush1.bf16.msra.mxu0 0
    %744 = vmatprep.subr.bf16.mxu0 0
    %745 = vmatpush1.bf16.msra.mxu0 0
    %746 = vmatprep.subr.bf16.mxu0 0
    %747 = vmatpush1.bf16.msra.mxu0 0
    %748 = vmatprep.subr.bf16.mxu0 0
    %749 = vmatpush1.bf16.msra.mxu0 0
    %750 = vmatprep.subr.bf16.mxu0 0
    %751 = vmatpush1.bf16.msra.mxu0 0
    %752 = vmatprep.subr.bf16.mxu0 0
    %753 = vmatpush1.bf16.msra.mxu0 0
    %754 = vmatprep.subr.bf16.mxu0 0
    %755 = vmatpush1.bf16.msra.mxu0 0
    %756 = vmatprep.mubr.bf16.mxu0 0
    %757 = vmatmul.mubr.bf16.gmra.mrb[0].mxu0 %v199
    %v758 = vpop.f32.mrb[0].mxu0
    %v759 = vadd.f32 %v718, %v758
    %v760 = vpop.f32.mrb[0].mxu0
    %v761 = vadd.f32 %v720, %v760
    %v762 = vpop.f32.mrb[0].mxu0
    %v763 = vpop.f32.mrb[0].mxu0
    %764 = vdwg.mxu0
    %765 = vmatprep.subr.bf16.mxu0 %v494
    %766 = vmatpush1.bf16.msra.mxu0 %v493
    %767 = vmatprep.subr.bf16.mxu0 %v498
    %768 = vmatpush1.bf16.msra.mxu0 %v497
    %769 = vmatprep.subr.bf16.mxu0 %v502
    %770 = vmatpush1.bf16.msra.mxu0 %v501
    %771 = vmatprep.subr.bf16.mxu0 %v506
    %772 = vmatpush1.bf16.msra.mxu0 %v505
    %773 = vmatprep.subr.bf16.mxu0 %v510
    %774 = vmatpush1.bf16.msra.mxu0 %v509
    %775 = vmatprep.subr.bf16.mxu0 %v514
    %776 = vmatpush1.bf16.msra.mxu0 %v513
    %777 = vmatprep.subr.bf16.mxu0 %v518
    %778 = vmatpush1.bf16.msra.mxu0 %v517
    %779 = vmatprep.subr.bf16.mxu0 %v522
    %780 = vmatpush1.bf16.msra.mxu0 %v521
    %781 = vmatprep.subr.bf16.mxu0 %v526
    %782 = vmatpush1.bf16.msra.mxu0 %v525
    %783 = vmatprep.subr.bf16.mxu0 %v530
    %784 = vmatpush1.bf16.msra.mxu0 %v529
    %785 = vmatprep.subr.bf16.mxu0 %v534
    %786 = vmatpush1.bf16.msra.mxu0 %v533
    %787 = vmatprep.subr.bf16.mxu0 %v538
    %788 = vmatpush1.bf16.msra.mxu0 %v537
    %789 = vmatprep.subr.bf16.mxu0 %v542
    %790 = vmatpush1.bf16.msra.mxu0 %v541
    %791 = vmatprep.subr.bf16.mxu0 %v546
    %792 = vmatpush1.bf16.msra.mxu0 %v545
    %793 = vmatprep.subr.bf16.mxu0 %v550
    %794 = vmatpush1.bf16.msra.mxu0 %v549
    %795 = vmatprep.subr.bf16.mxu0 %v554
    %796 = vmatpush1.bf16.msra.mxu0 %v553
    %797 = vmatprep.mubr.bf16.mxu0 %v198
    %798 = vmatmul.mubr.bf16.gmra.mrb[0].mxu0 %v191
    %v799 = vpop.f32.mrb[0].mxu0
    %v800 = vadd.f32 0.0, %v799
    %v801 = vpop.f32.mrb[0].mxu0
    %v802 = vadd.f32 0.0, %v801
    %v803 = vpop.f32.mrb[0].mxu0
    %v804 = vpop.f32.mrb[0].mxu0
    %805 = vdwg.mxu0
    %806 = vmatprep.subr.bf16.mxu0 %v558
    %807 = vmatpush1.bf16.msra.mxu0 %v557
    %808 = vmatprep.subr.bf16.mxu0 %v562
    %809 = vmatpush1.bf16.msra.mxu0 %v561
    %810 = vmatprep.subr.bf16.mxu0 %v566
    %811 = vmatpush1.bf16.msra.mxu0 %v565
    %812 = vmatprep.subr.bf16.mxu0 %v570
    %813 = vmatpush1.bf16.msra.mxu0 %v569
    %814 = vmatprep.subr.bf16.mxu0 %v574
    %815 = vmatpush1.bf16.msra.mxu0 %v573
    %816 = vmatprep.subr.bf16.mxu0 %v578
    %817 = vmatpush1.bf16.msra.mxu0 %v577
    %818 = vmatprep.subr.bf16.mxu0 %v582
    %819 = vmatpush1.bf16.msra.mxu0 %v581
    %820 = vmatprep.subr.bf16.mxu0 %v586
    %821 = vmatpush1.bf16.msra.mxu0 %v585
    %822 = vmatprep.subr.bf16.mxu0 0
    %823 = vmatpush1.bf16.msra.mxu0 0
    %824 = vmatprep.subr.bf16.mxu0 0
    %825 = vmatpush1.bf16.msra.mxu0 0
    %826 = vmatprep.subr.bf16.mxu0 0
    %827 = vmatpush1.bf16.msra.mxu0 0
    %828 = vmatprep.subr.bf16.mxu0 0
    %829 = vmatpush1.bf16.msra.mxu0 0
    %830 = vmatprep.subr.bf16.mxu0 0
    %831 = vmatpush1.bf16.msra.mxu0 0
    %832 = vmatprep.subr.bf16.mxu0 0
    %833 = vmatpush1.bf16.msra.mxu0 0
    %834 = vmatprep.subr.bf16.mxu0 0
    %835 = vmatpush1.bf16.msra.mxu0 0
    %836 = vmatprep.subr.bf16.mxu0 0
    %837 = vmatpush1.bf16.msra.mxu0 0
    %838 = vmatprep.mubr.bf16.mxu0 0
    %839 = vmatmul.mubr.bf16.gmra.mrb[0].mxu0 %v199
    %v840 = vpop.f32.mrb[0].mxu0
    %v841 = vadd.f32 %v800, %v840
    %v842 = vpop.f32.mrb[0].mxu0
    %v843 = vadd.f32 %v802, %v842
    %v844 = vpop.f32.mrb[0].mxu0
    %v845 = vpop.f32.mrb[0].mxu0
    %846 = vdwg.mxu0
    %v851 = vcombine.low %v759, %v761
    %v852 = vcombine.low %v841, %v843
    %v854 = vunpack.c.l.s4 1966171168
    %v855 = vunpack.c.0.s8 %v854
    %v856 = vlaneseq
    %v857 = vshrl.u32 %v856, 7
    %v858 = vsub.s32 %v855, %v857
    %v859 = vrot.slane %v851, %v858
    %v861 = vunpack.c.l.s4 1966171168
    %v862 = vunpack.c.0.s8 %v861
    %v863 = vlaneseq
    %v864 = vshrl.u32 %v863, 7
    %v865 = vsub.s32 %v862, %v864
    %v866 = vrot.slane %v852, %v865
    %v867 = vcombine.low %v859, %v866
    %v869 = vunpack.c.l.s4 1966171168
    %v870 = vunpack.c.0.s8 %v869
    %v871 = vlaneseq
    %v872 = vshrl.u32 %v871, 7
    %v873 = vsub.s32 %v870, %v872
    %v874 = vrot.slane %v867, %v873
    %v876 = vadd.f32 %v78, %v874
    %v877 = vlaneseq
    %vm878 = vcmp.ge.s32.totalorder %v877, 0
    %vm879 = vcmp.lt.s32.totalorder %v877, 512
    %vm880 = vmand %vm878, %vm879
    %881 = vst.msk [vmem:[#allocation2] sm:$0xf] %vm880, %v876
    // Predicated region
    $region46: #{forward.1} parent=1 // pred_check
      %p882 = pneg %p69
    $region47: #{forward.1} parent=1 // pred_check_branch
      %884 = sbr.rel (%p882) target = $region49
    $region48: #{forward.1} parent=1 // pred_region
      %v885 = vld [vmem:[#allocation2] sm:$0xf]
      %v886 = vld [vmem:[%s2] sm:$0xf]
      %v887 = vadd.f32 %v885, %v886
      %v888 = vxor.u32 %v887, 2147483648
      %v889 = vmul.f32 %v888, 1.442695
      %v890 = vpow.pop %v889
      %v891 = vadd.f32 %v890, 1.0
      %v892 = vrcp.pop %v891
      %v893 = vmul.f32 1.0, %v892
      %v895 = vrot.slane %v887, 2
      %v897 = vtanh.pop %v895
      %v898 = vrot.slane %v887, 3
      %v900 = vxor.u32 %v898, 2147483648
      %v901 = vmul.f32 %v900, 1.442695
      %v902 = vpow.pop %v901
      %v903 = vadd.f32 %v902, 1.0
      %v904 = vrcp.pop %v903
      %v905 = vmul.f32 1.0, %v904
      %v906 = vmul.f32 %v893, %v897
      %v907 = vtanh.pop %v906
      %v908 = vmul.f32 %v905, %v907
      %v909 = vpack.c.bf16 %v908, %v908
      %v910 = vld [vmem:[#allocation6] sm:$0xff]
      %v911 = vld [vmem:[#allocation6 + $0x8] sm:$0xff]
      %v912 = vld [vmem:[#allocation6 + $0x10] sm:$0xff]
      %v913 = vld [vmem:[#allocation6 + $0x18] sm:$0xff]
      %v914 = vld [vmem:[#allocation6 + $0x20] sm:$0xff]
      %v915 = vld [vmem:[#allocation6 + $0x28] sm:$0xff]
      %v916 = vld [vmem:[#allocation6 + $0x30] sm:$0xff]
      %v917 = vld [vmem:[#allocation6 + $0x38] sm:$0xff]
      %v918 = vld [vmem:[#allocation6 + $0x40] sm:$0xff]
      %v919 = vld [vmem:[#allocation6 + $0x48] sm:$0xff]
      %v920 = vld [vmem:[#allocation6 + $0x50] sm:$0xff]
      %v921 = vld [vmem:[#allocation6 + $0x58] sm:$0xff]
      %v922 = vld [vmem:[#allocation6 + $0x60] sm:$0xff]
      %v923 = vld [vmem:[#allocation6 + $0x68] sm:$0xff]
      %v924 = vld [vmem:[#allocation6 + $0x70] sm:$0xff]
      %v925 = vld [vmem:[#allocation6 + $0x78] sm:$0xff]
      %v926 = vld [vmem:[%s4] sm:$0x3]
      %v943 = vunpack.c.l.b16 %v910
      %v944 = vunpack.c.h.b16 %v910
      %v945 = vunpack.c.l.b16 %v911
      %v946 = vunpack.c.h.b16 %v911
      %v947 = vunpack.c.l.b16 %v912
      %v948 = vunpack.c.h.b16 %v912
      %v949 = vunpack.c.l.b16 %v913
      %v950 = vunpack.c.h.b16 %v913
      %v951 = vunpack.c.l.b16 %v914
      %v952 = vunpack.c.h.b16 %v914
      %v953 = vunpack.c.l.b16 %v915
      %v954 = vunpack.c.h.b16 %v915
      %v955 = vunpack.c.l.b16 %v916
      %v956 = vunpack.c.h.b16 %v916
      %v957 = vunpack.c.l.b16 %v917
      %v958 = vunpack.c.h.b16 %v917
      %v959 = vunpack.c.l.b16 %v918
      %v960 = vunpack.c.h.b16 %v918
      %v961 = vunpack.c.l.b16 %v919
      %v962 = vunpack.c.h.b16 %v919
      %v963 = vunpack.c.l.b16 %v920
      %v964 = vunpack.c.h.b16 %v920
      %v965 = vunpack.c.l.b16 %v921
      %v966 = vunpack.c.h.b16 %v921
      %v967 = vunpack.c.l.b16 %v922
      %v968 = vunpack.c.h.b16 %v922
      %v969 = vunpack.c.l.b16 %v923
      %v970 = vunpack.c.h.b16 %v923
      %v971 = vunpack.c.l.b16 %v924
      %v972 = vunpack.c.h.b16 %v924
      %v973 = vunpack.c.l.b16 %v925
      %v974 = vunpack.c.h.b16 %v925
      %v975 = vpack.c.b16 %v945, %v943
      %v976 = vpack.c.b16 %v946, %v944
      %v977 = vpack.c.b16 %v949, %v947
      %v978 = vpack.c.b16 %v950, %v948
      %v979 = vpack.c.b16 %v953, %v951
      %v980 = vpack.c.b16 %v954, %v952
      %v981 = vpack.c.b16 %v957, %v955
      %v982 = vpack.c.b16 %v958, %v956
      %v983 = vpack.c.b16 %v961, %v959
      %v984 = vpack.c.b16 %v962, %v960
      %v985 = vpack.c.b16 %v965, %v963
      %v986 = vpack.c.b16 %v966, %v964
      %v987 = vpack.c.b16 %v969, %v967
      %v988 = vpack.c.b16 %v970, %v968
      %v989 = vpack.c.b16 %v973, %v971
      %v990 = vpack.c.b16 %v974, %v972
      %v1008 = vlaneseq
      %v1009 = vshrl.u32 %v1008, 7
      %v1010 = vsub.s32 0, %v1009
      %v1011 = vrot.slane %v926, %v1010
      %v1012 = vlaneseq
      %v1013 = vshrl.u32 %v1012, 7
      %v1014 = vsub.s32 1, %v1013
      %v1015 = vrot.slane %v926, %v1014
      %1018 = vmatprep.subr.bf16.mxu0 %v976
      %1019 = vmatpush1.bf16.msra.mxu0 %v975
      %1020 = vmatprep.subr.bf16.mxu0 %v978
      %1021 = vmatpush1.bf16.msra.mxu0 %v977
      %1022 = vmatprep.subr.bf16.mxu0 %v980
      %1023 = vmatpush1.bf16.msra.mxu0 %v979
      %1024 = vmatprep.subr.bf16.mxu0 %v982
      %1025 = vmatpush1.bf16.msra.mxu0 %v981
      %1026 = vmatprep.subr.bf16.mxu0 %v984
      %1027 = vmatpush1.bf16.msra.mxu0 %v983
      %1028 = vmatprep.subr.bf16.mxu0 %v986
      %1029 = vmatpush1.bf16.msra.mxu0 %v985
      %1030 = vmatprep.subr.bf16.mxu0 %v988
      %1031 = vmatpush1.bf16.msra.mxu0 %v987
      %1032 = vmatprep.subr.bf16.mxu0 %v990
      %1033 = vmatpush1.bf16.msra.mxu0 %v989
      %1034 = vmatprep.subr.bf16.mxu0 0
      %1035 = vmatpush1.bf16.msra.mxu0 0
      %1036 = vmatprep.subr.bf16.mxu0 0
      %1037 = vmatpush1.bf16.msra.mxu0 0
      %1038 = vmatprep.subr.bf16.mxu0 0
      %1039 = vmatpush1.bf16.msra.mxu0 0
      %1040 = vmatprep.subr.bf16.mxu0 0
      %1041 = vmatpush1.bf16.msra.mxu0 0
      %1042 = vmatprep.subr.bf16.mxu0 0
      %1043 = vmatpush1.bf16.msra.mxu0 0
      %1044 = vmatprep.subr.bf16.mxu0 0
      %1045 = vmatpush1.bf16.msra.mxu0 0
      %1046 = vmatprep.subr.bf16.mxu0 0
      %1047 = vmatpush1.bf16.msra.mxu0 0
      %1048 = vmatprep.subr.bf16.mxu0 0
      %1049 = vmatpush1.bf16.msra.mxu0 0
      %1050 = vmatprep.mubr.bf16.mxu0 0
      %1051 = vmatmul.mubr.bf16.gmra.mrb[0].mxu0 %v909
      %v1052 = vpop.f32.mrb[0].mxu0
      %v1053 = vadd.f32 %v1011, %v1052
      %v1054 = vpop.f32.mrb[0].mxu0
      %v1055 = vadd.f32 %v1015, %v1054
      %v1056 = vpop.f32.mrb[0].mxu0
      %v1057 = vpop.f32.mrb[0].mxu0
      %1058 = vdwg.mxu0
      %v1059 = vmax.f32 %v1053, 0.0
      %v1060 = vmax.f32 %v1055, 0.0
      %v1061 = vpack.c.bf16 %v1059, %v1059
      %v1062 = vpack.c.bf16 %v1060, %v1060
      %v1063 = vld [vmem:[%s6] sm:$0xf]
      %v1064 = vld [vmem:[#allocation8] sm:$0xf]
      %v1065 = vld [vmem:[#allocation8 + $0x4] sm:$0xf]
      %v1066 = vld [vmem:[#allocation8 + $0x8] sm:$0xf]
      %v1067 = vld [vmem:[#allocation8 + $0xc] sm:$0xf]
      %v1068 = vld [vmem:[#allocation8 + $0x10] sm:$0xf]
      %v1069 = vld [vmem:[#allocation8 + $0x14] sm:$0xf]
      %v1070 = vld [vmem:[#allocation8 + $0x18] sm:$0xf]
      %v1071 = vld [vmem:[#allocation8 + $0x1c] sm:$0xf]
      %v1072 = vld [vmem:[#allocation8 + $0x20] sm:$0xf]
      %v1073 = vld [vmem:[#allocation8 + $0x24] sm:$0xf]
      %v1074 = vld [vmem:[#allocation8 + $0x28] sm:$0xf]
      %v1075 = vld [vmem:[#allocation8 + $0x2c] sm:$0xf]
      %v1076 = vld [vmem:[#allocation8 + $0x30] sm:$0xf]
      %v1077 = vld [vmem:[#allocation8 + $0x34] sm:$0xf]
      %v1078 = vld [vmem:[#allocation8 + $0x38] sm:$0xf]
      %v1079 = vld [vmem:[#allocation8 + $0x3c] sm:$0xf]
      %v1080 = vld [vmem:[#allocation8 + $0x40] sm:$0xf]
      %v1081 = vld [vmem:[#allocation8 + $0x44] sm:$0xf]
      %v1082 = vld [vmem:[#allocation8 + $0x48] sm:$0xf]
      %v1083 = vld [vmem:[#allocation8 + $0x4c] sm:$0xf]
      %v1084 = vld [vmem:[#allocation8 + $0x50] sm:$0xf]
      %v1085 = vld [vmem:[#allocation8 + $0x54] sm:$0xf]
      %v1086 = vld [vmem:[#allocation8 + $0x58] sm:$0xf]
      %v1087 = vld [vmem:[#allocation8 + $0x5c] sm:$0xf]
      %v1088 = vld [vmem:[#allocation8 + $0x60] sm:$0xf]
      %v1089 = vld [vmem:[#allocation8 + $0x64] sm:$0xf]
      %v1090 = vld [vmem:[#allocation8 + $0x68] sm:$0xf]
      %v1091 = vld [vmem:[#allocation8 + $0x6c] sm:$0xf]
      %v1092 = vld [vmem:[#allocation8 + $0x70] sm:$0xf]
      %v1093 = vld [vmem:[#allocation8 + $0x74] sm:$0xf]
      %v1094 = vld [vmem:[#allocation8 + $0x78] sm:$0xf]
      %v1095 = vld [vmem:[#allocation8 + $0x7c] sm:$0xf]
      %v1128 = vunpack.c.l.b16 %v1064
      %v1129 = vunpack.c.l.b16 %v1065
      %v1130 = vunpack.c.l.b16 %v1066
      %v1131 = vunpack.c.l.b16 %v1067
      %v1132 = vunpack.c.l.b16 %v1068
      %v1133 = vunpack.c.l.b16 %v1069
      %v1134 = vunpack.c.l.b16 %v1070
      %v1135 = vunpack.c.l.b16 %v1071
      %v1136 = vunpack.c.l.b16 %v1072
      %v1137 = vunpack.c.l.b16 %v1073
      %v1138 = vunpack.c.l.b16 %v1074
      %v1139 = vunpack.c.l.b16 %v1075
      %v1140 = vunpack.c.l.b16 %v1076
      %v1141 = vunpack.c.l.b16 %v1077
      %v1142 = vunpack.c.l.b16 %v1078
      %v1143 = vunpack.c.l.b16 %v1079
      %v1144 = vunpack.c.l.b16 %v1080
      %v1145 = vunpack.c.l.b16 %v1081
      %v1146 = vunpack.c.l.b16 %v1082
      %v1147 = vunpack.c.l.b16 %v1083
      %v1148 = vunpack.c.l.b16 %v1084
      %v1149 = vunpack.c.l.b16 %v1085
      %v1150 = vunpack.c.l.b16 %v1086
      %v1151 = vunpack.c.l.b16 %v1087
      %v1152 = vunpack.c.l.b16 %v1088
      %v1153 = vunpack.c.l.b16 %v1089
      %v1154 = vunpack.c.l.b16 %v1090
      %v1155 = vunpack.c.l.b16 %v1091
      %v1156 = vunpack.c.l.b16 %v1092
      %v1157 = vunpack.c.l.b16 %v1093
      %v1158 = vunpack.c.l.b16 %v1094
      %v1159 = vunpack.c.l.b16 %v1095
      %v1160 = vpack.c.b16 %v1129, %v1128
      %v1161 = vpack.c.b16 %v1131, %v1130
      %v1162 = vpack.c.b16 %v1133, %v1132
      %v1163 = vpack.c.b16 %v1135, %v1134
      %v1164 = vpack.c.b16 %v1137, %v1136
      %v1165 = vpack.c.b16 %v1139, %v1138
      %v1166 = vpack.c.b16 %v1141, %v1140
      %v1167 = vpack.c.b16 %v1143, %v1142
      %v1168 = vpack.c.b16 %v1145, %v1144
      %v1169 = vpack.c.b16 %v1147, %v1146
      %v1170 = vpack.c.b16 %v1149, %v1148
      %v1171 = vpack.c.b16 %v1151, %v1150
      %v1172 = vpack.c.b16 %v1153, %v1152
      %v1173 = vpack.c.b16 %v1155, %v1154
      %v1174 = vpack.c.b16 %v1157, %v1156
      %v1175 = vpack.c.b16 %v1159, %v1158
      %1192 = vmatprep.subr.bf16.mxu0 0
      %1193 = vmatpush1.bf16.msra.mxu0 %v1160
      %1194 = vmatprep.subr.bf16.mxu0 0
      %1195 = vmatpush1.bf16.msra.mxu0 %v1161
      %1196 = vmatprep.subr.bf16.mxu0 0
      %1197 = vmatpush1.bf16.msra.mxu0 %v1162
      %1198 = vmatprep.subr.bf16.mxu0 0
      %1199 = vmatpush1.bf16.msra.mxu0 %v1163
      %1200 = vmatprep.subr.bf16.mxu0 0
      %1201 = vmatpush1.bf16.msra.mxu0 %v1164
      %1202 = vmatprep.subr.bf16.mxu0 0
      %1203 = vmatpush1.bf16.msra.mxu0 %v1165
      %1204 = vmatprep.subr.bf16.mxu0 0
      %1205 = vmatpush1.bf16.msra.mxu0 %v1166
      %1206 = vmatprep.subr.bf16.mxu0 0
      %1207 = vmatpush1.bf16.msra.mxu0 %v1167
      %1208 = vmatprep.subr.bf16.mxu0 0
      %1209 = vmatpush1.bf16.msra.mxu0 %v1168
      %1210 = vmatprep.subr.bf16.mxu0 0
      %1211 = vmatpush1.bf16.msra.mxu0 %v1169
      %1212 = vmatprep.subr.bf16.mxu0 0
      %1213 = vmatpush1.bf16.msra.mxu0 %v1170
      %1214 = vmatprep.subr.bf16.mxu0 0
      %1215 = vmatpush1.bf16.msra.mxu0 %v1171
      %1216 = vmatprep.subr.bf16.mxu0 0
      %1217 = vmatpush1.bf16.msra.mxu0 %v1172
      %1218 = vmatprep.subr.bf16.mxu0 0
      %1219 = vmatpush1.bf16.msra.mxu0 %v1173
      %1220 = vmatprep.subr.bf16.mxu0 0
      %1221 = vmatpush1.bf16.msra.mxu0 %v1174
      %1222 = vmatprep.subr.bf16.mxu0 0
      %1223 = vmatpush1.bf16.msra.mxu0 %v1175
      %1224 = vmatprep.mubr.bf16.mxu0 %v1062
      %1225 = vmatmul.mubr.bf16.gmra.mrb[0].mxu0 %v1061
      %v1226 = vpop.f32.mrb[0].mxu0
      %v1227 = vadd.f32 %v1063, %v1226
      %v1228 = vpop.f32.mrb[0].mxu0
      %v1229 = vpop.f32.mrb[0].mxu0
      %v1230 = vpop.f32.mrb[0].mxu0
      %1231 = vdwg.mxu0
      %vm1232 = vcmask 1040384
      %v1233 = vsel %vm1232, %v1227, -inf
      %1234 = vmax.xlane.f32.xlu0 %v1233
      %v1235 = vpop.xlane.xlu0 %1234
      %v1236 = vsub.f32 %v1227, %v1235
      %v1237 = vmul.f32 %v1236, 1.442695
      %v1238 = vpow.pop %v1237
      %v1239 = vsel %vm1232, %v1238, 0.0
      %1240 = vadd.xlane.f32.xlu0 %v1239
      %v1241 = vpop.xlane.xlu0 %1240
      %v1242 = vrcp.pop %v1241
      %v1243 = vmul.f32 %v1238, %v1242
      %1244 = vst [vmem:[#allocation9] sm:$0x1] %v1243
      %s1245 = scalar_lea.vmem [#allocation8], 128
      %v1246 = vld [vmem:[%s1245] sm:$0xf]
      %v1247 = vld [vmem:[%s1245 + $0x4] sm:$0xf]
      %v1248 = vld [vmem:[%s1245 + $0x8] sm:$0xf]
      %v1249 = vld [vmem:[%s1245 + $0xc] sm:$0xf]
      %v1250 = vld [vmem:[%s1245 + $0x10] sm:$0xf]
      %v1251 = vld [vmem:[%s1245 + $0x14] sm:$0xf]
      %v1252 = vld [vmem:[%s1245 + $0x18] sm:$0xf]
      %v1253 = vld [vmem:[%s1245 + $0x1c] sm:$0xf]
      %v1254 = vld [vmem:[%s1245 + $0x20] sm:$0xf]
      %v1255 = vld [vmem:[%s1245 + $0x24] sm:$0xf]
      %v1256 = vld [vmem:[%s1245 + $0x28] sm:$0xf]
      %v1257 = vld [vmem:[%s1245 + $0x2c] sm:$0xf]
      %v1258 = vld [vmem:[%s1245 + $0x30] sm:$0xf]
      %v1259 = vld [vmem:[%s1245 + $0x34] sm:$0xf]
      %v1260 = vld [vmem:[%s1245 + $0x38] sm:$0xf]
      %v1261 = vld [vmem:[%s1245 + $0x3c] sm:$0xf]
      %v1262 = vld [vmem:[%s1245 + $0x40] sm:$0xf]
      %v1263 = vld [vmem:[%s1245 + $0x44] sm:$0xf]
      %v1264 = vld [vmem:[%s1245 + $0x48] sm:$0xf]
      %v1265 = vld [vmem:[%s1245 + $0x4c] sm:$0xf]
      %v1266 = vld [vmem:[%s1245 + $0x50] sm:$0xf]
      %v1267 = vld [vmem:[%s1245 + $0x54] sm:$0xf]
      %v1268 = vld [vmem:[%s1245 + $0x58] sm:$0xf]
      %v1269 = vld [vmem:[%s1245 + $0x5c] sm:$0xf]
      %v1270 = vld [vmem:[%s1245 + $0x60] sm:$0xf]
      %v1271 = vld [vmem:[%s1245 + $0x64] sm:$0xf]
      %v1272 = vld [vmem:[%s1245 + $0x68] sm:$0xf]
      %v1273 = vld [vmem:[%s1245 + $0x6c] sm:$0xf]
      %v1274 = vld [vmem:[%s1245 + $0x70] sm:$0xf]
      %v1275 = vld [vmem:[%s1245 + $0x74] sm:$0xf]
      %v1276 = vld [vmem:[%s1245 + $0x78] sm:$0xf]
      %v1277 = vld [vmem:[%s1245 + $0x7c] sm:$0xf]
      %v1310 = vunpack.c.l.b16 %v1246
      %v1311 = vunpack.c.l.b16 %v1247
      %v1312 = vunpack.c.l.b16 %v1248
      %v1313 = vunpack.c.l.b16 %v1249
      %v1314 = vunpack.c.l.b16 %v1250
      %v1315 = vunpack.c.l.b16 %v1251
      %v1316 = vunpack.c.l.b16 %v1252
      %v1317 = vunpack.c.l.b16 %v1253
      %v1318 = vunpack.c.l.b16 %v1254
      %v1319 = vunpack.c.l.b16 %v1255
      %v1320 = vunpack.c.l.b16 %v1256
      %v1321 = vunpack.c.l.b16 %v1257
      %v1322 = vunpack.c.l.b16 %v1258
      %v1323 = vunpack.c.l.b16 %v1259
      %v1324 = vunpack.c.l.b16 %v1260
      %v1325 = vunpack.c.l.b16 %v1261
      %v1326 = vunpack.c.l.b16 %v1262
      %v1327 = vunpack.c.l.b16 %v1263
      %v1328 = vunpack.c.l.b16 %v1264
      %v1329 = vunpack.c.l.b16 %v1265
      %v1330 = vunpack.c.l.b16 %v1266
      %v1331 = vunpack.c.l.b16 %v1267
      %v1332 = vunpack.c.l.b16 %v1268
      %v1333 = vunpack.c.l.b16 %v1269
      %v1334 = vunpack.c.l.b16 %v1270
      %v1335 = vunpack.c.l.b16 %v1271
      %v1336 = vunpack.c.l.b16 %v1272
      %v1337 = vunpack.c.l.b16 %v1273
      %v1338 = vunpack.c.l.b16 %v1274
      %v1339 = vunpack.c.l.b16 %v1275
      %v1340 = vunpack.c.l.b16 %v1276
      %v1341 = vunpack.c.l.b16 %v1277
      %v1342 = vpack.c.b16 %v1311, %v1310
      %v1343 = vpack.c.b16 %v1313, %v1312
      %v1344 = vpack.c.b16 %v1315, %v1314
      %v1345 = vpack.c.b16 %v1317, %v1316
      %v1346 = vpack.c.b16 %v1319, %v1318
      %v1347 = vpack.c.b16 %v1321, %v1320
      %v1348 = vpack.c.b16 %v1323, %v1322
      %v1349 = vpack.c.b16 %v1325, %v1324
      %v1350 = vpack.c.b16 %v1327, %v1326
      %v1351 = vpack.c.b16 %v1329, %v1328
      %v1352 = vpack.c.b16 %v1331, %v1330
      %v1353 = vpack.c.b16 %v1333, %v1332
      %v1354 = vpack.c.b16 %v1335, %v1334
      %v1355 = vpack.c.b16 %v1337, %v1336
      %v1356 = vpack.c.b16 %v1339, %v1338
      %v1357 = vpack.c.b16 %v1341, %v1340
      %v1375 = vrot.slane %v1063, 1
      %1377 = vmatprep.subr.bf16.mxu0 0
      %1378 = vmatpush1.bf16.msra.mxu0 %v1342
      %1379 = vmatprep.subr.bf16.mxu0 0
      %1380 = vmatpush1.bf16.msra.mxu0 %v1343
      %1381 = vmatprep.subr.bf16.mxu0 0
      %1382 = vmatpush1.bf16.msra.mxu0 %v1344
      %1383 = vmatprep.subr.bf16.mxu0 0
      %1384 = vmatpush1.bf16.msra.mxu0 %v1345
      %1385 = vmatprep.subr.bf16.mxu0 0
      %1386 = vmatpush1.bf16.msra.mxu0 %v1346
      %1387 = vmatprep.subr.bf16.mxu0 0
      %1388 = vmatpush1.bf16.msra.mxu0 %v1347
      %1389 = vmatprep.subr.bf16.mxu0 0
      %1390 = vmatpush1.bf16.msra.mxu0 %v1348
      %1391 = vmatprep.subr.bf16.mxu0 0
      %1392 = vmatpush1.bf16.msra.mxu0 %v1349
      %1393 = vmatprep.subr.bf16.mxu0 0
      %1394 = vmatpush1.bf16.msra.mxu0 %v1350
      %1395 = vmatprep.subr.bf16.mxu0 0
      %1396 = vmatpush1.bf16.msra.mxu0 %v1351
      %1397 = vmatprep.subr.bf16.mxu0 0
      %1398 = vmatpush1.bf16.msra.mxu0 %v1352
      %1399 = vmatprep.subr.bf16.mxu0 0
      %1400 = vmatpush1.bf16.msra.mxu0 %v1353
      %1401 = vmatprep.subr.bf16.mxu0 0
      %1402 = vmatpush1.bf16.msra.mxu0 %v1354
      %1403 = vmatprep.subr.bf16.mxu0 0
      %1404 = vmatpush1.bf16.msra.mxu0 %v1355
      %1405 = vmatprep.subr.bf16.mxu0 0
      %1406 = vmatpush1.bf16.msra.mxu0 %v1356
      %1407 = vmatprep.subr.bf16.mxu0 0
      %1408 = vmatpush1.bf16.msra.mxu0 %v1357
      %1409 = vmatprep.mubr.bf16.mxu0 %v1062
      %1410 = vmatmul.mubr.bf16.gmra.mrb[0].mxu0 %v1061
      %v1411 = vpop.f32.mrb[0].mxu0
      %v1412 = vadd.f32 %v1375, %v1411
      %v1413 = vpop.f32.mrb[0].mxu0
      %v1414 = vpop.f32.mrb[0].mxu0
      %v1415 = vpop.f32.mrb[0].mxu0
      %1416 = vdwg.mxu0
      %v1417 = vsel %vm1232, %v1412, -inf
      %1418 = vmax.xlane.f32.xlu0 %v1417
      %v1419 = vpop.xlane.xlu0 %1418
      %v1420 = vsub.f32 %v1412, %v1419
      %v1421 = vmul.f32 %v1420, 1.442695
      %v1422 = vpow.pop %v1421
      %v1423 = vsel %vm1232, %v1422, 0.0
      %1424 = vadd.xlane.f32.xlu0 %v1423
      %v1425 = vpop.xlane.xlu0 %1424
      %v1426 = vrcp.pop %v1425
      %v1427 = vmul.f32 %v1422, %v1426
      %1428 = vst [vmem:[#allocation9 + $0x1] sm:$0x1] %v1427
      %s1429 = scalar_lea.vmem [#allocation8], 256
      %v1430 = vld [vmem:[%s1429] sm:$0xf]
      %v1431 = vld [vmem:[%s1429 + $0x4] sm:$0xf]
      %v1432 = vld [vmem:[%s1429 + $0x8] sm:$0xf]
      %v1433 = vld [vmem:[%s1429 + $0xc] sm:$0xf]
      %v1434 = vld [vmem:[%s1429 + $0x10] sm:$0xf]
      %v1435 = vld [vmem:[%s1429 + $0x14] sm:$0xf]
      %v1436 = vld [vmem:[%s1429 + $0x18] sm:$0xf]
      %v1437 = vld [vmem:[%s1429 + $0x1c] sm:$0xf]
      %v1438 = vld [vmem:[%s1429 + $0x20] sm:$0xf]
      %v1439 = vld [vmem:[%s1429 + $0x24] sm:$0xf]
      %v1440 = vld [vmem:[%s1429 + $0x28] sm:$0xf]
      %v1441 = vld [vmem:[%s1429 + $0x2c] sm:$0xf]
      %v1442 = vld [vmem:[%s1429 + $0x30] sm:$0xf]
      %v1443 = vld [vmem:[%s1429 + $0x34] sm:$0xf]
      %v1444 = vld [vmem:[%s1429 + $0x38] sm:$0xf]
      %v1445 = vld [vmem:[%s1429 + $0x3c] sm:$0xf]
      %v1446 = vld [vmem:[%s1429 + $0x40] sm:$0xf]
      %v1447 = vld [vmem:[%s1429 + $0x44] sm:$0xf]
      %v1448 = vld [vmem:[%s1429 + $0x48] sm:$0xf]
      %v1449 = vld [vmem:[%s1429 + $0x4c] sm:$0xf]
      %v1450 = vld [vmem:[%s1429 + $0x50] sm:$0xf]
      %v1451 = vld [vmem:[%s1429 + $0x54] sm:$0xf]
      %v1452 = vld [vmem:[%s1429 + $0x58] sm:$0xf]
      %v1453 = vld [vmem:[%s1429 + $0x5c] sm:$0xf]
      %v1454 = vld [vmem:[%s1429 + $0x60] sm:$0xf]
      %v1455 = vld [vmem:[%s1429 + $0x64] sm:$0xf]
      %v1456 = vld [vmem:[%s1429 + $0x68] sm:$0xf]
      %v1457 = vld [vmem:[%s1429 + $0x6c] sm:$0xf]
      %v1458 = vld [vmem:[%s1429 + $0x70] sm:$0xf]
      %v1459 = vld [vmem:[%s1429 + $0x74] sm:$0xf]
      %v1460 = vld [vmem:[%s1429 + $0x78] sm:$0xf]
      %v1461 = vld [vmem:[%s1429 + $0x7c] sm:$0xf]
      %v1494 = vunpack.c.l.b16 %v1430
      %v1495 = vunpack.c.l.b16 %v1431
      %v1496 = vunpack.c.l.b16 %v1432
      %v1497 = vunpack.c.l.b16 %v1433
      %v1498 = vunpack.c.l.b16 %v1434
      %v1499 = vunpack.c.l.b16 %v1435
      %v1500 = vunpack.c.l.b16 %v1436
      %v1501 = vunpack.c.l.b16 %v1437
      %v1502 = vunpack.c.l.b16 %v1438
      %v1503 = vunpack.c.l.b16 %v1439
      %v1504 = vunpack.c.l.b16 %v1440
      %v1505 = vunpack.c.l.b16 %v1441
      %v1506 = vunpack.c.l.b16 %v1442
      %v1507 = vunpack.c.l.b16 %v1443
      %v1508 = vunpack.c.l.b16 %v1444
      %v1509 = vunpack.c.l.b16 %v1445
      %v1510 = vunpack.c.l.b16 %v1446
      %v1511 = vunpack.c.l.b16 %v1447
      %v1512 = vunpack.c.l.b16 %v1448
      %v1513 = vunpack.c.l.b16 %v1449
      %v1514 = vunpack.c.l.b16 %v1450
      %v1515 = vunpack.c.l.b16 %v1451
      %v1516 = vunpack.c.l.b16 %v1452
      %v1517 = vunpack.c.l.b16 %v1453
      %v1518 = vunpack.c.l.b16 %v1454
      %v1519 = vunpack.c.l.b16 %v1455
      %v1520 = vunpack.c.l.b16 %v1456
      %v1521 = vunpack.c.l.b16 %v1457
      %v1522 = vunpack.c.l.b16 %v1458
      %v1523 = vunpack.c.l.b16 %v1459
      %v1524 = vunpack.c.l.b16 %v1460
      %v1525 = vunpack.c.l.b16 %v1461
      %v1526 = vpack.c.b16 %v1495, %v1494
      %v1527 = vpack.c.b16 %v1497, %v1496
      %v1528 = vpack.c.b16 %v1499, %v1498
      %v1529 = vpack.c.b16 %v1501, %v1500
      %v1530 = vpack.c.b16 %v1503, %v1502
      %v1531 = vpack.c.b16 %v1505, %v1504
      %v1532 = vpack.c.b16 %v1507, %v1506
      %v1533 = vpack.c.b16 %v1509, %v1508
      %v1534 = vpack.c.b16 %v1511, %v1510
      %v1535 = vpack.c.b16 %v1513, %v1512
      %v1536 = vpack.c.b16 %v1515, %v1514
      %v1537 = vpack.c.b16 %v1517, %v1516
      %v1538 = vpack.c.b16 %v1519, %v1518
      %v1539 = vpack.c.b16 %v1521, %v1520
      %v1540 = vpack.c.b16 %v1523, %v1522
      %v1541 = vpack.c.b16 %v1525, %v1524
      %v1558 = vrot.slane %v1063, 2
      %1560 = vmatprep.subr.bf16.mxu0 0
      %1561 = vmatpush1.bf16.msra.mxu0 %v1526
      %1562 = vmatprep.subr.bf16.mxu0 0
      %1563 = vmatpush1.bf16.msra.mxu0 %v1527
      %1564 = vmatprep.subr.bf16.mxu0 0
      %1565 = vmatpush1.bf16.msra.mxu0 %v1528
      %1566 = vmatprep.subr.bf16.mxu0 0
      %1567 = vmatpush1.bf16.msra.mxu0 %v1529
      %1568 = vmatprep.subr.bf16.mxu0 0
      %1569 = vmatpush1.bf16.msra.mxu0 %v1530
      %1570 = vmatprep.subr.bf16.mxu0 0
      %1571 = vmatpush1.bf16.msra.mxu0 %v1531
      %1572 = vmatprep.subr.bf16.mxu0 0
      %1573 = vmatpush1.bf16.msra.mxu0 %v1532
      %1574 = vmatprep.subr.bf16.mxu0 0
      %1575 = vmatpush1.bf16.msra.mxu0 %v1533
      %1576 = vmatprep.subr.bf16.mxu0 0
      %1577 = vmatpush1.bf16.msra.mxu0 %v1534
      %1578 = vmatprep.subr.bf16.mxu0 0
      %1579 = vmatpush1.bf16.msra.mxu0 %v1535
      %1580 = vmatprep.subr.bf16.mxu0 0
      %1581 = vmatpush1.bf16.msra.mxu0 %v1536
      %1582 = vmatprep.subr.bf16.mxu0 0
      %1583 = vmatpush1.bf16.msra.mxu0 %v1537
      %1584 = vmatprep.subr.bf16.mxu0 0
      %1585 = vmatpush1.bf16.msra.mxu0 %v1538
      %1586 = vmatprep.subr.bf16.mxu0 0
      %1587 = vmatpush1.bf16.msra.mxu0 %v1539
      %1588 = vmatprep.subr.bf16.mxu0 0
      %1589 = vmatpush1.bf16.msra.mxu0 %v1540
      %1590 = vmatprep.subr.bf16.mxu0 0
      %1591 = vmatpush1.bf16.msra.mxu0 %v1541
      %1592 = vmatprep.mubr.bf16.mxu0 %v1062
      %1593 = vmatmul.mubr.bf16.gmra.mrb[0].mxu0 %v1061
      %v1594 = vpop.f32.mrb[0].mxu0
      %v1595 = vadd.f32 %v1558, %v1594
      %v1596 = vpop.f32.mrb[0].mxu0
      %v1597 = vpop.f32.mrb[0].mxu0
      %v1598 = vpop.f32.mrb[0].mxu0
      %1599 = vdwg.mxu0
      %v1600 = vsel %vm1232, %v1595, -inf
      %1601 = vmax.xlane.f32.xlu0 %v1600
      %v1602 = vpop.xlane.xlu0 %1601
      %v1603 = vsub.f32 %v1595, %v1602
      %v1604 = vmul.f32 %v1603, 1.442695
      %v1605 = vpow.pop %v1604
      %v1606 = vsel %vm1232, %v1605, 0.0
      %1607 = vadd.xlane.f32.xlu0 %v1606
      %v1608 = vpop.xlane.xlu0 %1607
      %v1609 = vrcp.pop %v1608
      %v1610 = vmul.f32 %v1605, %v1609
      %1611 = vst [vmem:[#allocation9 + $0x2] sm:$0x1] %v1610
      %s1612 = scalar_lea.vmem [#allocation8], 384
      %v1613 = vld [vmem:[%s1612] sm:$0xf]
      %v1614 = vld [vmem:[%s1612 + $0x4] sm:$0xf]
      %v1615 = vld [vmem:[%s1612 + $0x8] sm:$0xf]
      %v1616 = vld [vmem:[%s1612 + $0xc] sm:$0xf]
      %v1617 = vld [vmem:[%s1612 + $0x10] sm:$0xf]
      %v1618 = vld [vmem:[%s1612 + $0x14] sm:$0xf]
      %v1619 = vld [vmem:[%s1612 + $0x18] sm:$0xf]
      %v1620 = vld [vmem:[%s1612 + $0x1c] sm:$0xf]
      %v1621 = vld [vmem:[%s1612 + $0x20] sm:$0xf]
      %v1622 = vld [vmem:[%s1612 + $0x24] sm:$0xf]
      %v1623 = vld [vmem:[%s1612 + $0x28] sm:$0xf]
      %v1624 = vld [vmem:[%s1612 + $0x2c] sm:$0xf]
      %v1625 = vld [vmem:[%s1612 + $0x30] sm:$0xf]
      %v1626 = vld [vmem:[%s1612 + $0x34] sm:$0xf]
      %v1627 = vld [vmem:[%s1612 + $0x38] sm:$0xf]
      %v1628 = vld [vmem:[%s1612 + $0x3c] sm:$0xf]
      %v1629 = vld [vmem:[%s1612 + $0x40] sm:$0xf]
      %v1630 = vld [vmem:[%s1612 + $0x44] sm:$0xf]
      %v1631 = vld [vmem:[%s1612 + $0x48] sm:$0xf]
      %v1632 = vld [vmem:[%s1612 + $0x4c] sm:$0xf]
      %v1633 = vld [vmem:[%s1612 + $0x50] sm:$0xf]
      %v1634 = vld [vmem:[%s1612 + $0x54] sm:$0xf]
      %v1635 = vld [vmem:[%s1612 + $0x58] sm:$0xf]
      %v1636 = vld [vmem:[%s1612 + $0x5c] sm:$0xf]
      %v1637 = vld [vmem:[%s1612 + $0x60] sm:$0xf]
      %v1638 = vld [vmem:[%s1612 + $0x64] sm:$0xf]
      %v1639 = vld [vmem:[%s1612 + $0x68] sm:$0xf]
      %v1640 = vld [vmem:[%s1612 + $0x6c] sm:$0xf]
      %v1641 = vld [vmem:[%s1612 + $0x70] sm:$0xf]
      %v1642 = vld [vmem:[%s1612 + $0x74] sm:$0xf]
      %v1643 = vld [vmem:[%s1612 + $0x78] sm:$0xf]
      %v1644 = vld [vmem:[%s1612 + $0x7c] sm:$0xf]
      %v1677 = vunpack.c.l.b16 %v1613
      %v1678 = vunpack.c.l.b16 %v1614
      %v1679 = vunpack.c.l.b16 %v1615
      %v1680 = vunpack.c.l.b16 %v1616
      %v1681 = vunpack.c.l.b16 %v1617
      %v1682 = vunpack.c.l.b16 %v1618
      %v1683 = vunpack.c.l.b16 %v1619
      %v1684 = vunpack.c.l.b16 %v1620
      %v1685 = vunpack.c.l.b16 %v1621
      %v1686 = vunpack.c.l.b16 %v1622
      %v1687 = vunpack.c.l.b16 %v1623
      %v1688 = vunpack.c.l.b16 %v1624
      %v1689 = vunpack.c.l.b16 %v1625
      %v1690 = vunpack.c.l.b16 %v1626
      %v1691 = vunpack.c.l.b16 %v1627
      %v1692 = vunpack.c.l.b16 %v1628
      %v1693 = vunpack.c.l.b16 %v1629
      %v1694 = vunpack.c.l.b16 %v1630
      %v1695 = vunpack.c.l.b16 %v1631
      %v1696 = vunpack.c.l.b16 %v1632
      %v1697 = vunpack.c.l.b16 %v1633
      %v1698 = vunpack.c.l.b16 %v1634
      %v1699 = vunpack.c.l.b16 %v1635
      %v1700 = vunpack.c.l.b16 %v1636
      %v1701 = vunpack.c.l.b16 %v1637
      %v1702 = vunpack.c.l.b16 %v1638
      %v1703 = vunpack.c.l.b16 %v1639
      %v1704 = vunpack.c.l.b16 %v1640
      %v1705 = vunpack.c.l.b16 %v1641
      %v1706 = vunpack.c.l.b16 %v1642
      %v1707 = vunpack.c.l.b16 %v1643
      %v1708 = vunpack.c.l.b16 %v1644
      %v1709 = vpack.c.b16 %v1678, %v1677
      %v1710 = vpack.c.b16 %v1680, %v1679
      %v1711 = vpack.c.b16 %v1682, %v1681
      %v1712 = vpack.c.b16 %v1684, %v1683
      %v1713 = vpack.c.b16 %v1686, %v1685
      %v1714 = vpack.c.b16 %v1688, %v1687
      %v1715 = vpack.c.b16 %v1690, %v1689
      %v1716 = vpack.c.b16 %v1692, %v1691
      %v1717 = vpack.c.b16 %v1694, %v1693
      %v1718 = vpack.c.b16 %v1696, %v1695
      %v1719 = vpack.c.b16 %v1698, %v1697
      %v1720 = vpack.c.b16 %v1700, %v1699
      %v1721 = vpack.c.b16 %v1702, %v1701
      %v1722 = vpack.c.b16 %v1704, %v1703
      %v1723 = vpack.c.b16 %v1706, %v1705
      %v1724 = vpack.c.b16 %v1708, %v1707
      %v1741 = vrot.slane %v1063, 3
      %1743 = vmatprep.subr.bf16.mxu0 0
      %1744 = vmatpush1.bf16.msra.mxu0 %v1709
      %1745 = vmatprep.subr.bf16.mxu0 0
      %1746 = vmatpush1.bf16.msra.mxu0 %v1710
      %1747 = vmatprep.subr.bf16.mxu0 0
      %1748 = vmatpush1.bf16.msra.mxu0 %v1711
      %1749 = vmatprep.subr.bf16.mxu0 0
      %1750 = vmatpush1.bf16.msra.mxu0 %v1712
      %1751 = vmatprep.subr.bf16.mxu0 0
      %1752 = vmatpush1.bf16.msra.mxu0 %v1713
      %1753 = vmatprep.subr.bf16.mxu0 0
      %1754 = vmatpush1.bf16.msra.mxu0 %v1714
      %1755 = vmatprep.subr.bf16.mxu0 0
      %1756 = vmatpush1.bf16.msra.mxu0 %v1715
      %1757 = vmatprep.subr.bf16.mxu0 0
      %1758 = vmatpush1.bf16.msra.mxu0 %v1716
      %1759 = vmatprep.subr.bf16.mxu0 0
      %1760 = vmatpush1.bf16.msra.mxu0 %v1717
      %1761 = vmatprep.subr.bf16.mxu0 0
      %1762 = vmatpush1.bf16.msra.mxu0 %v1718
      %1763 = vmatprep.subr.bf16.mxu0 0
      %1764 = vmatpush1.bf16.msra.mxu0 %v1719
      %1765 = vmatprep.subr.bf16.mxu0 0
      %1766 = vmatpush1.bf16.msra.mxu0 %v1720
      %1767 = vmatprep.subr.bf16.mxu0 0
      %1768 = vmatpush1.bf16.msra.mxu0 %v1721
      %1769 = vmatprep.subr.bf16.mxu0 0
      %1770 = vmatpush1.bf16.msra.mxu0 %v1722
      %1771 = vmatprep.subr.bf16.mxu0 0
      %1772 = vmatpush1.bf16.msra.mxu0 %v1723
      %1773 = vmatprep.subr.bf16.mxu0 0
      %1774 = vmatpush1.bf16.msra.mxu0 %v1724
      %1775 = vmatprep.mubr.bf16.mxu0 %v1062
      %1776 = vmatmul.mubr.bf16.gmra.mrb[0].mxu0 %v1061
      %v1777 = vpop.f32.mrb[0].mxu0
      %v1778 = vadd.f32 %v1741, %v1777
      %v1779 = vpop.f32.mrb[0].mxu0
      %v1780 = vpop.f32.mrb[0].mxu0
      %v1781 = vpop.f32.mrb[0].mxu0
      %1782 = vdwg.mxu0
      %v1783 = vsel %vm1232, %v1778, -inf
      %1784 = vmax.xlane.f32.xlu0 %v1783
      %v1785 = vpop.xlane.xlu0 %1784
      %v1786 = vsub.f32 %v1778, %v1785
      %v1787 = vmul.f32 %v1786, 1.442695
      %v1788 = vpow.pop %v1787
      %v1789 = vsel %vm1232, %v1788, 0.0
      %1790 = vadd.xlane.f32.xlu0 %v1789
      %v1791 = vpop.xlane.xlu0 %1790
      %v1792 = vrcp.pop %v1791
      %v1793 = vmul.f32 %v1788, %v1792
      %1794 = vst [vmem:[#allocation9 + $0x3] sm:$0x1] %v1793
    $region49: #{forward.1} parent=1 // pred_fallthru
      _
    // Predicated region
    $region50: #{forward.1} parent=1 // pred_check
      _
    $region51: #{forward.1} parent=1 // pred_check_branch
      %1796 = sbr.rel (0) target = $region53
    $region52: #{forward.1} parent=1 // pred_region
      %s1798 = ssub.s32 64, 64
      %1799 = vsyncadd [#allocation5], %s1798
      %s1801 = sshll.u32 [#allocation9], 4
      %s1802 = int_to_ptr.vmem [resolvable:$true] %s1801
      %1804 = dma.vmem_to_hbm [thread:$0]  %s1802, 64, %s7, [#allocation5]
    $region53: #{forward.1} parent=1 // pred_fallthru
      _
    // Predicated region
    $region54: #{forward.1} parent=1 // pred_check
      _
    $region55: #{forward.1} parent=1 // pred_check_branch
      %1806 = sbr.rel (0) target = $region57
    $region56: #{forward.1} parent=1 // pred_region
      %1807 = dma.done [#allocation5], 64
    $region57: #{forward.1} parent=1 // pred_fallthru
      _
    %1808 = vsyncpa [#allocation4], 1
    %1809 = vsyncpa [#allocation7], 1
    %1810 = vsyncpa [#allocation5], 1

</llo_original>
